<compile_context>
chip_gen: v7x
topology: tpu7x:2x2x1
jax: 0.10.0
libtpu: 0.0.40
codegen_flags: <defaults>
</compile_context>

<pallas_src>
import math

import jax
import jax.numpy as jnp
from jax.experimental import pallas as pl
from jax.experimental.pallas import tpu as pltpu

N_LAYERS = 4
LR_MUL = 0.01
NEG_SLOPE = 0.2
FLRELU_SCALE = math.sqrt(2.0)
PIXELNORM_EPS = 1e-8


def _round_up(x, m):
    return ((x + m - 1) // m) * m


def _cdiv(a, b):
    return -(-a // b)


def _choose_tiling(n, max_tile=512):
    """Pick (tile_n, n_pad): big-enough MXU-height tiles, >=2 grid steps for the v7x
    2-TC split once the batch allows it, and padding kept under one tile's worth."""
    if n <= 256:
        tile = _round_up(max(n, 8), 8)
        return tile, tile
    # 512-row tiles only when they still leave >=4 grid steps; else 256-row (full MXU height).
    tile = max_tile if n >= 4 * max_tile else 256
    steps = _cdiv(n, tile)
    # Re-derive tile from the step count so awkward N doesn't pay ~2x padded MXU work.
    tile = min(max_tile, _round_up(_cdiv(n, steps), 8))
    return tile, steps * tile


def mapper_kernel(x_ref, w_ref, b_ref, o_ref):
    # x_ref: (TN, D) f32
    # w_ref: (4, D, D) bf16, pre-transposed to (in, out) with eq_scale*lr_mul folded in
    # b_ref: (4, 1, D) f32, pre-scaled by lr_mul
    tn = x_ref.shape[0]

    def pixel_norm(v):
        return v * jax.lax.rsqrt(jnp.mean(v * v, axis=-1, keepdims=True) + PIXELNORM_EPS)

    def layer(v_bf16, i):
        # EqualLinear: scale already folded into w; fused_leaky_relu's sqrt(2) folded into
        # the select constants -> single select-mul epilogue on the VPU.
        y = jnp.dot(v_bf16, w_ref[i], preferred_element_type=jnp.float32) + b_ref[i]
        return y * jnp.where(y >= 0.0, FLRELU_SCALE, NEG_SLOPE * FLRELU_SCALE)

    split = (tn >= 16) and (tn % 16 == 0)
    if split:
        # Two independent row sub-tiles: the scheduler can overlap sub-tile B's layer-i
        # MXU matmul with sub-tile A's VPU epilogue (and A's layer-i+1 matmul with B's
        # epilogue), hiding the otherwise-serial epilogue between matmuls.
        h = tn // 2
        xa = pixel_norm(x_ref[:h, :].astype(jnp.float32)).astype(jnp.bfloat16)
        xb = pixel_norm(x_ref[h:, :].astype(jnp.float32)).astype(jnp.bfloat16)
        ya = yb = None
        for i in range(N_LAYERS):
            ya = layer(xa, i)
            yb = layer(xb, i)
            if i + 1 < N_LAYERS:
                xa = ya.astype(jnp.bfloat16)
                xb = yb.astype(jnp.bfloat16)
        o_ref[:h, :] = ya.astype(o_ref.dtype)
        o_ref[h:, :] = yb.astype(o_ref.dtype)
    else:
        x = pixel_norm(x_ref[...].astype(jnp.float32)).astype(jnp.bfloat16)
        y = None
        for i in range(N_LAYERS):
            y = layer(x, i)
            if i + 1 < N_LAYERS:
                x = y.astype(jnp.bfloat16)
        o_ref[...] = y.astype(o_ref.dtype)


def prepare_mapper_params(weights, biases):
    """One-time param prep (hoist out of the forward path).

    weights: (4, D_out, D_in) PyTorch layout, biases: (4, D_out).
    Returns (w_prepped bf16 (4, D_in, D_out) with eq_scale folded, b_prepped f32 (4,1,D))."""
    n_layers, d_out, d_in = weights.shape
    eq_scale = (1.0 / math.sqrt(d_in)) * LR_MUL
    # Fold the scale BEFORE the bf16 cast so there is only a single rounding step.
    w_prepped = jnp.transpose(weights.astype(jnp.float32) * eq_scale, (0, 2, 1)).astype(jnp.bfloat16)
    b_prepped = (biases.astype(jnp.float32) * LR_MUL).reshape(n_layers, 1, d_out)
    return w_prepped, b_prepped


def mapper_forward(x, w_prepped, b_prepped, *, max_tile=512, out_dtype=jnp.float32):
    """x: (N, D) f32; w_prepped/b_prepped from prepare_mapper_params."""
    N, D = x.shape
    tile_n, n_pad = _choose_tiling(N, max_tile=max_tile)
    x_p = jnp.pad(x, ((0, n_pad - N), (0, 0))) if n_pad != N else x

    cost = pl.CostEstimate(
        flops=2 * n_pad * D * D * N_LAYERS,
        transcendentals=n_pad,  # one rsqrt per row (PixelNorm)
        bytes_accessed=(n_pad * D * 4) + (w_prepped.size * 2) + (b_prepped.size * 4)
        + n_pad * D * jnp.dtype(out_dtype).itemsize,
    )

    # Explicit VMEM budget: double-buffered in/out tiles + single-buffered bf16 weights
    # + headroom for f32 activation temporaries; bounded to stay inside v7x's 64 MiB
    # while lifting v5e's ~16 MiB default scoped limit.
    vmem_bytes = int(
        4 * tile_n * D * 4            # in + out, double-buffered
        + w_prepped.size * 2          # bf16 weights, single buffer
        + b_prepped.size * 4
        + 6 * tile_n * D * 4          # f32/bf16 temporaries headroom
    )
    vmem_bytes = min(max(vmem_bytes, 32 << 20), 48 << 20)

    out = pl.pallas_call(
        mapper_kernel,
        out_shape=jax.ShapeDtypeStruct((n_pad, D), out_dtype),
        grid_spec=pltpu.PrefetchScalarGridSpec(
            num_scalar_prefetch=0,
            grid=(n_pad // tile_n,),
            in_specs=[
                pl.BlockSpec((tile_n, D), lambda i: (i, 0)),
                # Grid-invariant weight/bias blocks: constant index_map + single buffer
                # (no pointless double-buffer copy of the 4xDxD bf16 weights in VMEM).
                pl.BlockSpec((N_LAYERS, D, D), lambda i: (0, 0, 0),
                             pipeline_mode=pl.Buffered(1)),
                pl.BlockSpec((N_LAYERS, 1, D), lambda i: (0, 0, 0),
                             pipeline_mode=pl.Buffered(1)),
            ],
            out_specs=pl.BlockSpec((tile_n, D), lambda i: (i, 0)),
        ),
        compiler_params=pltpu.CompilerParams(
            # Batch axis: "parallel" shards grid steps across v7x's 2 TensorCores;
            # harmless no-op on single-TC v5e/v6e.
            dimension_semantics=("parallel",),
            vmem_limit_bytes=vmem_bytes,
        ),
        cost_estimate=cost,
    )(x_p, w_prepped, b_prepped)
    return out[:N]


def mapper_reference_f32(x, weights, biases):
    """Pure-JAX f32 reference mirroring the PyTorch forward semantics."""
    D = x.shape[-1]
    eq_scale = (1.0 / math.sqrt(D)) * LR_MUL
    h = x * jax.lax.rsqrt(jnp.mean(x * x, axis=-1, keepdims=True) + PIXELNORM_EPS)
    for i in range(N_LAYERS):
        y = h @ (weights[i] * eq_scale).T + biases[i] * LR_MUL
        h = jnp.where(y >= 0.0, y, NEG_SLOPE * y) * FLRELU_SCALE
    return h


def mapper_reference_bf16(x, weights, biases):
    """Reference using the same scale-folded bf16-matmul / f32-accumulate recipe as the kernel."""
    D = x.shape[-1]
    eq_scale = (1.0 / math.sqrt(D)) * LR_MUL
    h = x * jax.lax.rsqrt(jnp.mean(x * x, axis=-1, keepdims=True) + PIXELNORM_EPS)
    for i in range(N_LAYERS):
        w = (weights[i] * eq_scale).T.astype(jnp.bfloat16)  # (in, out), scale folded pre-cast
        y = jnp.dot(h.astype(jnp.bfloat16), w,
                    preferred_element_type=jnp.float32) + biases[i] * LR_MUL
        h = y * jnp.where(y >= 0.0, FLRELU_SCALE, NEG_SLOPE * FLRELU_SCALE)
    return h


if __name__ == "__main__":
    key = jax.random.PRNGKey(0)
    k_x, k_w = jax.random.split(key)

    # Small, module-consistent shapes (module default latent_dim=512; D=128 keeps it light).
    N, D = 512, 128
    x = jax.random.normal(k_x, (N, D), dtype=jnp.float32)

    # Deterministic params matching the module __init__ shapes:
    #   weight ~ randn(out, in) / lr_mul,  bias = zeros(out)
    weights = jax.random.normal(k_w, (N_LAYERS, D, D), dtype=jnp.float32) / LR_MUL
    biases = jnp.zeros((N_LAYERS, D), dtype=jnp.float32)

    # One-time param prep (transpose + eq_scale fold + bf16 cast), hoisted off the hot path.
    w_prepped, b_prepped = prepare_mapper_params(weights, biases)

    out = mapper_forward(x, w_prepped, b_prepped)
    out = jax.block_until_ready(out)
    assert out.shape == (N, D)
    assert bool(jnp.all(jnp.isfinite(out)))

    # Strict check against a reference using the same bf16-matmul recipe.
    ref_bf16 = mapper_reference_bf16(x, weights, biases)
    assert jnp.allclose(out, ref_bf16, atol=1e-2, rtol=1e-2), "mismatch vs bf16 reference"

    # Sanity: aggregate deviation from the full-f32 reference stays small
    # (only source is bf16 weight/activation quantization in the matmuls).
    ref_f32 = mapper_reference_f32(x, weights, biases)
    rel = jnp.linalg.norm(out - ref_f32) / jnp.linalg.norm(ref_f32)
    assert rel < 8e-2, f"relative error vs f32 reference too large: {rel}"

    # Also exercise an awkward batch size (padding-minimizing tile path).
    x_odd = jax.random.normal(k_x, (300, D), dtype=jnp.float32)
    out_odd = jax.block_until_ready(mapper_forward(x_odd, w_prepped, b_prepped))
    ref_odd = mapper_reference_bf16(x_odd, weights, biases)
    assert jnp.allclose(out_odd, ref_odd, atol=1e-2, rtol=1e-2), "mismatch on odd batch"

    print("KERNEL_OK")
</pallas_src>

<mosaic_0001>
module attributes {stable_mosaic.version = 11 : i64} {
  func.func @mapper_kernel(%arg0: i32, %arg1: memref<256x128xf32, #tpu.memory_space<vmem>>, %arg2: memref<4x128x128xbf16, #tpu.memory_space<vmem>>, %arg3: memref<4x1x128xf32, #tpu.memory_space<vmem>>, %arg4: memref<256x128xf32, #tpu.memory_space<vmem>>) attributes {dimension_semantics = [#tpu.dimension_semantics<parallel>], iteration_bounds = array<i64: 2>, scalar_prefetch = 0 : i64, scratch_operands = 0 : i64, tpu.core_type = #tpu.core_type<tc>, window_params = [{transform_indices = @transform_0, window_bounds = array<i64: 256, 128>}, {pipeline_mode = #tpu.pipeline_mode<synchronous>, transform_indices = @transform_1, window_bounds = array<i64: 4, 128, 128>}, {pipeline_mode = #tpu.pipeline_mode<synchronous>, transform_indices = @transform_2, window_bounds = array<i64: 4, 1, 128>}, {transform_indices = @transform_3, window_bounds = array<i64: 256, 128>}]} {
    %c0 = arith.constant 0 : index
    %c0_0 = arith.constant 0 : index
    %0 = vector.load %arg1[%c0, %c0_0] : memref<256x128xf32, #tpu.memory_space<vmem>>, vector<128x128xf32>
    %1 = arith.mulf %0, %0 : vector<128x128xf32>
    %cst = arith.constant dense<0.000000e+00> : vector<128xf32>
    %2 = vector.multi_reduction <add>, %1, %cst [1] : vector<128x128xf32> to vector<128xf32>
    %3 = vector.shape_cast %2 : vector<128xf32> to vector<128x1xf32>
    %cst_1 = arith.constant 1.280000e+02 : f32
    %4 = vector.broadcast %cst_1 : f32 to vector<128x1xf32>
    %5 = arith.divf %3, %4 : vector<128x1xf32>
    %cst_2 = arith.constant 9.99999993E-9 : f32
    %6 = vector.broadcast %cst_2 : f32 to vector<128x1xf32>
    %7 = arith.addf %5, %6 : vector<128x1xf32>
    %8 = math.rsqrt %7 : vector<128x1xf32>
    %9 = vector.broadcast %8 : vector<128x1xf32> to vector<128x128xf32>
    %10 = arith.mulf %0, %9 : vector<128x128xf32>
    %11 = arith.truncf %10 : vector<128x128xf32> to vector<128x128xbf16>
    %c128 = arith.constant 128 : index
    %c0_3 = arith.constant 0 : index
    %12 = vector.load %arg1[%c128, %c0_3] : memref<256x128xf32, #tpu.memory_space<vmem>>, vector<128x128xf32>
    %13 = arith.mulf %12, %12 : vector<128x128xf32>
    %cst_4 = arith.constant dense<0.000000e+00> : vector<128xf32>
    %14 = vector.multi_reduction <add>, %13, %cst_4 [1] : vector<128x128xf32> to vector<128xf32>
    %15 = vector.shape_cast %14 : vector<128xf32> to vector<128x1xf32>
    %cst_5 = arith.constant 1.280000e+02 : f32
    %16 = vector.broadcast %cst_5 : f32 to vector<128x1xf32>
    %17 = arith.divf %15, %16 : vector<128x1xf32>
    %cst_6 = arith.constant 9.99999993E-9 : f32
    %18 = vector.broadcast %cst_6 : f32 to vector<128x1xf32>
    %19 = arith.addf %17, %18 : vector<128x1xf32>
    %20 = math.rsqrt %19 : vector<128x1xf32>
    %21 = vector.broadcast %20 : vector<128x1xf32> to vector<128x128xf32>
    %22 = arith.mulf %12, %21 : vector<128x128xf32>
    %23 = arith.truncf %22 : vector<128x128xf32> to vector<128x128xbf16>
    %c0_7 = arith.constant 0 : index
    %c0_8 = arith.constant 0 : index
    %c0_9 = arith.constant 0 : index
    %24 = vector.load %arg2[%c0_7, %c0_8, %c0_9] : memref<4x128x128xbf16, #tpu.memory_space<vmem>>, vector<1x128x128xbf16>
    %25 = vector.shape_cast %24 : vector<1x128x128xbf16> to vector<128x128xbf16>
    %cst_10 = arith.constant dense<0.000000e+00> : vector<128x128xf32>
    %26 = tpu.matmul %11, %25, %cst_10 {dimension_numbers = #tpu.dot_dimension_numbers<[1], [0], [0], [1], [0, 0, 1, 1], [], []>} : vector<128x128xbf16>, vector<128x128xbf16>, vector<128x128xf32> -> vector<128x128xf32>
    %c0_11 = arith.constant 0 : index
    %c0_12 = arith.constant 0 : index
    %c0_13 = arith.constant 0 : index
    %27 = vector.load %arg3[%c0_11, %c0_12, %c0_13] : memref<4x1x128xf32, #tpu.memory_space<vmem>>, vector<1x1x128xf32>
    %28 = vector.shape_cast %27 : vector<1x1x128xf32> to vector<1x128xf32>
    %29 = vector.broadcast %28 : vector<1x128xf32> to vector<128x128xf32>
    %30 = arith.addf %26, %29 : vector<128x128xf32>
    %cst_14 = arith.constant 0.000000e+00 : f32
    %31 = vector.broadcast %cst_14 : f32 to vector<128x128xf32>
    %32 = arith.cmpf oge, %30, %31 : vector<128x128xf32>
    %cst_15 = arith.constant 1.41421354 : f32
    %cst_16 = arith.constant 0.282842726 : f32
    %33 = vector.broadcast %cst_15 : f32 to vector<128x128xf32>
    %34 = vector.broadcast %cst_16 : f32 to vector<128x128xf32>
    %35 = arith.select %32, %33, %34 : vector<128x128xi1>, vector<128x128xf32>
    %36 = arith.mulf %30, %35 : vector<128x128xf32>
    %c0_17 = arith.constant 0 : index
    %c0_18 = arith.constant 0 : index
    %c0_19 = arith.constant 0 : index
    %37 = vector.load %arg2[%c0_17, %c0_18, %c0_19] : memref<4x128x128xbf16, #tpu.memory_space<vmem>>, vector<1x128x128xbf16>
    %38 = vector.shape_cast %37 : vector<1x128x128xbf16> to vector<128x128xbf16>
    %cst_20 = arith.constant dense<0.000000e+00> : vector<128x128xf32>
    %39 = tpu.matmul %23, %38, %cst_20 {dimension_numbers = #tpu.dot_dimension_numbers<[1], [0], [0], [1], [0, 0, 1, 1], [], []>} : vector<128x128xbf16>, vector<128x128xbf16>, vector<128x128xf32> -> vector<128x128xf32>
    %c0_21 = arith.constant 0 : index
    %c0_22 = arith.constant 0 : index
    %c0_23 = arith.constant 0 : index
    %40 = vector.load %arg3[%c0_21, %c0_22, %c0_23] : memref<4x1x128xf32, #tpu.memory_space<vmem>>, vector<1x1x128xf32>
    %41 = vector.shape_cast %40 : vector<1x1x128xf32> to vector<1x128xf32>
    %42 = vector.broadcast %41 : vector<1x128xf32> to vector<128x128xf32>
    %43 = arith.addf %39, %42 : vector<128x128xf32>
    %cst_24 = arith.constant 0.000000e+00 : f32
    %44 = vector.broadcast %cst_24 : f32 to vector<128x128xf32>
    %45 = arith.cmpf oge, %43, %44 : vector<128x128xf32>
    %cst_25 = arith.constant 1.41421354 : f32
    %cst_26 = arith.constant 0.282842726 : f32
    %46 = vector.broadcast %cst_25 : f32 to vector<128x128xf32>
    %47 = vector.broadcast %cst_26 : f32 to vector<128x128xf32>
    %48 = arith.select %45, %46, %47 : vector<128x128xi1>, vector<128x128xf32>
    %49 = arith.mulf %43, %48 : vector<128x128xf32>
    %50 = arith.truncf %36 : vector<128x128xf32> to vector<128x128xbf16>
    %51 = arith.truncf %49 : vector<128x128xf32> to vector<128x128xbf16>
    %c1 = arith.constant 1 : index
    %c0_27 = arith.constant 0 : index
    %c0_28 = arith.constant 0 : index
    %52 = vector.load %arg2[%c1, %c0_27, %c0_28] : memref<4x128x128xbf16, #tpu.memory_space<vmem>>, vector<1x128x128xbf16>
    %53 = vector.shape_cast %52 : vector<1x128x128xbf16> to vector<128x128xbf16>
    %cst_29 = arith.constant dense<0.000000e+00> : vector<128x128xf32>
    %54 = tpu.matmul %50, %53, %cst_29 {dimension_numbers = #tpu.dot_dimension_numbers<[1], [0], [0], [1], [0, 0, 1, 1], [], []>} : vector<128x128xbf16>, vector<128x128xbf16>, vector<128x128xf32> -> vector<128x128xf32>
    %c1_30 = arith.constant 1 : index
    %c0_31 = arith.constant 0 : index
    %c0_32 = arith.constant 0 : index
    %55 = vector.load %arg3[%c1_30, %c0_31, %c0_32] : memref<4x1x128xf32, #tpu.memory_space<vmem>>, vector<1x1x128xf32>
    %56 = vector.shape_cast %55 : vector<1x1x128xf32> to vector<1x128xf32>
    %57 = vector.broadcast %56 : vector<1x128xf32> to vector<128x128xf32>
    %58 = arith.addf %54, %57 : vector<128x128xf32>
    %cst_33 = arith.constant 0.000000e+00 : f32
    %59 = vector.broadcast %cst_33 : f32 to vector<128x128xf32>
    %60 = arith.cmpf oge, %58, %59 : vector<128x128xf32>
    %cst_34 = arith.constant 1.41421354 : f32
    %cst_35 = arith.constant 0.282842726 : f32
    %61 = vector.broadcast %cst_34 : f32 to vector<128x128xf32>
    %62 = vector.broadcast %cst_35 : f32 to vector<128x128xf32>
    %63 = arith.select %60, %61, %62 : vector<128x128xi1>, vector<128x128xf32>
    %64 = arith.mulf %58, %63 : vector<128x128xf32>
    %c1_36 = arith.constant 1 : index
    %c0_37 = arith.constant 0 : index
    %c0_38 = arith.constant 0 : index
    %65 = vector.load %arg2[%c1_36, %c0_37, %c0_38] : memref<4x128x128xbf16, #tpu.memory_space<vmem>>, vector<1x128x128xbf16>
    %66 = vector.shape_cast %65 : vector<1x128x128xbf16> to vector<128x128xbf16>
    %cst_39 = arith.constant dense<0.000000e+00> : vector<128x128xf32>
    %67 = tpu.matmul %51, %66, %cst_39 {dimension_numbers = #tpu.dot_dimension_numbers<[1], [0], [0], [1], [0, 0, 1, 1], [], []>} : vector<128x128xbf16>, vector<128x128xbf16>, vector<128x128xf32> -> vector<128x128xf32>
    %c1_40 = arith.constant 1 : index
    %c0_41 = arith.constant 0 : index
    %c0_42 = arith.constant 0 : index
    %68 = vector.load %arg3[%c1_40, %c0_41, %c0_42] : memref<4x1x128xf32, #tpu.memory_space<vmem>>, vector<1x1x128xf32>
    %69 = vector.shape_cast %68 : vector<1x1x128xf32> to vector<1x128xf32>
    %70 = vector.broadcast %69 : vector<1x128xf32> to vector<128x128xf32>
    %71 = arith.addf %67, %70 : vector<128x128xf32>
    %cst_43 = arith.constant 0.000000e+00 : f32
    %72 = vector.broadcast %cst_43 : f32 to vector<128x128xf32>
    %73 = arith.cmpf oge, %71, %72 : vector<128x128xf32>
    %cst_44 = arith.constant 1.41421354 : f32
    %cst_45 = arith.constant 0.282842726 : f32
    %74 = vector.broadcast %cst_44 : f32 to vector<128x128xf32>
    %75 = vector.broadcast %cst_45 : f32 to vector<128x128xf32>
    %76 = arith.select %73, %74, %75 : vector<128x128xi1>, vector<128x128xf32>
    %77 = arith.mulf %71, %76 : vector<128x128xf32>
    %78 = arith.truncf %64 : vector<128x128xf32> to vector<128x128xbf16>
    %79 = arith.truncf %77 : vector<128x128xf32> to vector<128x128xbf16>
    %c2 = arith.constant 2 : index
    %c0_46 = arith.constant 0 : index
    %c0_47 = arith.constant 0 : index
    %80 = vector.load %arg2[%c2, %c0_46, %c0_47] : memref<4x128x128xbf16, #tpu.memory_space<vmem>>, vector<1x128x128xbf16>
    %81 = vector.shape_cast %80 : vector<1x128x128xbf16> to vector<128x128xbf16>
    %cst_48 = arith.constant dense<0.000000e+00> : vector<128x128xf32>
    %82 = tpu.matmul %78, %81, %cst_48 {dimension_numbers = #tpu.dot_dimension_numbers<[1], [0], [0], [1], [0, 0, 1, 1], [], []>} : vector<128x128xbf16>, vector<128x128xbf16>, vector<128x128xf32> -> vector<128x128xf32>
    %c2_49 = arith.constant 2 : index
    %c0_50 = arith.constant 0 : index
    %c0_51 = arith.constant 0 : index
    %83 = vector.load %arg3[%c2_49, %c0_50, %c0_51] : memref<4x1x128xf32, #tpu.memory_space<vmem>>, vector<1x1x128xf32>
    %84 = vector.shape_cast %83 : vector<1x1x128xf32> to vector<1x128xf32>
    %85 = vector.broadcast %84 : vector<1x128xf32> to vector<128x128xf32>
    %86 = arith.addf %82, %85 : vector<128x128xf32>
    %cst_52 = arith.constant 0.000000e+00 : f32
    %87 = vector.broadcast %cst_52 : f32 to vector<128x128xf32>
    %88 = arith.cmpf oge, %86, %87 : vector<128x128xf32>
    %cst_53 = arith.constant 1.41421354 : f32
    %cst_54 = arith.constant 0.282842726 : f32
    %89 = vector.broadcast %cst_53 : f32 to vector<128x128xf32>
    %90 = vector.broadcast %cst_54 : f32 to vector<128x128xf32>
    %91 = arith.select %88, %89, %90 : vector<128x128xi1>, vector<128x128xf32>
    %92 = arith.mulf %86, %91 : vector<128x128xf32>
    %c2_55 = arith.constant 2 : index
    %c0_56 = arith.constant 0 : index
    %c0_57 = arith.constant 0 : index
    %93 = vector.load %arg2[%c2_55, %c0_56, %c0_57] : memref<4x128x128xbf16, #tpu.memory_space<vmem>>, vector<1x128x128xbf16>
    %94 = vector.shape_cast %93 : vector<1x128x128xbf16> to vector<128x128xbf16>
    %cst_58 = arith.constant dense<0.000000e+00> : vector<128x128xf32>
    %95 = tpu.matmul %79, %94, %cst_58 {dimension_numbers = #tpu.dot_dimension_numbers<[1], [0], [0], [1], [0, 0, 1, 1], [], []>} : vector<128x128xbf16>, vector<128x128xbf16>, vector<128x128xf32> -> vector<128x128xf32>
    %c2_59 = arith.constant 2 : index
    %c0_60 = arith.constant 0 : index
    %c0_61 = arith.constant 0 : index
    %96 = vector.load %arg3[%c2_59, %c0_60, %c0_61] : memref<4x1x128xf32, #tpu.memory_space<vmem>>, vector<1x1x128xf32>
    %97 = vector.shape_cast %96 : vector<1x1x128xf32> to vector<1x128xf32>
    %98 = vector.broadcast %97 : vector<1x128xf32> to vector<128x128xf32>
    %99 = arith.addf %95, %98 : vector<128x128xf32>
    %cst_62 = arith.constant 0.000000e+00 : f32
    %100 = vector.broadcast %cst_62 : f32 to vector<128x128xf32>
    %101 = arith.cmpf oge, %99, %100 : vector<128x128xf32>
    %cst_63 = arith.constant 1.41421354 : f32
    %cst_64 = arith.constant 0.282842726 : f32
    %102 = vector.broadcast %cst_63 : f32 to vector<128x128xf32>
    %103 = vector.broadcast %cst_64 : f32 to vector<128x128xf32>
    %104 = arith.select %101, %102, %103 : vector<128x128xi1>, vector<128x128xf32>
    %105 = arith.mulf %99, %104 : vector<128x128xf32>
    %106 = arith.truncf %92 : vector<128x128xf32> to vector<128x128xbf16>
    %107 = arith.truncf %105 : vector<128x128xf32> to vector<128x128xbf16>
    %c3 = arith.constant 3 : index
    %c0_65 = arith.constant 0 : index
    %c0_66 = arith.constant 0 : index
    %108 = vector.load %arg2[%c3, %c0_65, %c0_66] : memref<4x128x128xbf16, #tpu.memory_space<vmem>>, vector<1x128x128xbf16>
    %109 = vector.shape_cast %108 : vector<1x128x128xbf16> to vector<128x128xbf16>
    %cst_67 = arith.constant dense<0.000000e+00> : vector<128x128xf32>
    %110 = tpu.matmul %106, %109, %cst_67 {dimension_numbers = #tpu.dot_dimension_numbers<[1], [0], [0], [1], [0, 0, 1, 1], [], []>} : vector<128x128xbf16>, vector<128x128xbf16>, vector<128x128xf32> -> vector<128x128xf32>
    %c3_68 = arith.constant 3 : index
    %c0_69 = arith.constant 0 : index
    %c0_70 = arith.constant 0 : index
    %111 = vector.load %arg3[%c3_68, %c0_69, %c0_70] : memref<4x1x128xf32, #tpu.memory_space<vmem>>, vector<1x1x128xf32>
    %112 = vector.shape_cast %111 : vector<1x1x128xf32> to vector<1x128xf32>
    %113 = vector.broadcast %112 : vector<1x128xf32> to vector<128x128xf32>
    %114 = arith.addf %110, %113 : vector<128x128xf32>
    %cst_71 = arith.constant 0.000000e+00 : f32
    %115 = vector.broadcast %cst_71 : f32 to vector<128x128xf32>
    %116 = arith.cmpf oge, %114, %115 : vector<128x128xf32>
    %cst_72 = arith.constant 1.41421354 : f32
    %cst_73 = arith.constant 0.282842726 : f32
    %117 = vector.broadcast %cst_72 : f32 to vector<128x128xf32>
    %118 = vector.broadcast %cst_73 : f32 to vector<128x128xf32>
    %119 = arith.select %116, %117, %118 : vector<128x128xi1>, vector<128x128xf32>
    %120 = arith.mulf %114, %119 : vector<128x128xf32>
    %c3_74 = arith.constant 3 : index
    %c0_75 = arith.constant 0 : index
    %c0_76 = arith.constant 0 : index
    %121 = vector.load %arg2[%c3_74, %c0_75, %c0_76] : memref<4x128x128xbf16, #tpu.memory_space<vmem>>, vector<1x128x128xbf16>
    %122 = vector.shape_cast %121 : vector<1x128x128xbf16> to vector<128x128xbf16>
    %cst_77 = arith.constant dense<0.000000e+00> : vector<128x128xf32>
    %123 = tpu.matmul %107, %122, %cst_77 {dimension_numbers = #tpu.dot_dimension_numbers<[1], [0], [0], [1], [0, 0, 1, 1], [], []>} : vector<128x128xbf16>, vector<128x128xbf16>, vector<128x128xf32> -> vector<128x128xf32>
    %c3_78 = arith.constant 3 : index
    %c0_79 = arith.constant 0 : index
    %c0_80 = arith.constant 0 : index
    %124 = vector.load %arg3[%c3_78, %c0_79, %c0_80] : memref<4x1x128xf32, #tpu.memory_space<vmem>>, vector<1x1x128xf32>
    %125 = vector.shape_cast %124 : vector<1x1x128xf32> to vector<1x128xf32>
    %126 = vector.broadcast %125 : vector<1x128xf32> to vector<128x128xf32>
    %127 = arith.addf %123, %126 : vector<128x128xf32>
    %cst_81 = arith.constant 0.000000e+00 : f32
    %128 = vector.broadcast %cst_81 : f32 to vector<128x128xf32>
    %129 = arith.cmpf oge, %127, %128 : vector<128x128xf32>
    %cst_82 = arith.constant 1.41421354 : f32
    %cst_83 = arith.constant 0.282842726 : f32
    %130 = vector.broadcast %cst_82 : f32 to vector<128x128xf32>
    %131 = vector.broadcast %cst_83 : f32 to vector<128x128xf32>
    %132 = arith.select %129, %130, %131 : vector<128x128xi1>, vector<128x128xf32>
    %133 = arith.mulf %127, %132 : vector<128x128xf32>
    %c0_84 = arith.constant 0 : index
    %c0_85 = arith.constant 0 : index
    %134 = vector.load %arg4[%c0_84, %c0_85] : memref<256x128xf32, #tpu.memory_space<vmem>>, vector<128x128xf32>
    tpu.vector_store %arg4[%c0_84, %c0_85], %120 {strides = array<i32>} : memref<256x128xf32, #tpu.memory_space<vmem>>, vector<128x128xf32>,
    %c128_86 = arith.constant 128 : index
    %c0_87 = arith.constant 0 : index
    %135 = vector.load %arg4[%c128_86, %c0_87] : memref<256x128xf32, #tpu.memory_space<vmem>>, vector<128x128xf32>
    tpu.vector_store %arg4[%c128_86, %c0_87], %133 {strides = array<i32>} : memref<256x128xf32, #tpu.memory_space<vmem>>, vector<128x128xf32>,
    return
  }
  func.func @transform_0(%arg0: i32) -> (i32, i32) {
    %c0_i32 = arith.constant 0 : i32
    %c0_i32_0 = arith.constant 0 : i32
    return %arg0, %c0_i32 : i32, i32
  }
  func.func @transform_1(%arg0: i32) -> (i32, i32, i32) {
    %c0_i32 = arith.constant 0 : i32
    %c0_i32_0 = arith.constant 0 : i32
    %c0_i32_1 = arith.constant 0 : i32
    %c0_i32_2 = arith.constant 0 : i32
    return %c0_i32, %c0_i32_0, %c0_i32_1 : i32, i32, i32
  }
  func.func @transform_2(%arg0: i32) -> (i32, i32, i32) {
    %c0_i32 = arith.constant 0 : i32
    %c0_i32_0 = arith.constant 0 : i32
    %c0_i32_1 = arith.constant 0 : i32
    %c0_i32_2 = arith.constant 0 : i32
    return %c0_i32, %c0_i32_0, %c0_i32_1 : i32, i32, i32
  }
  func.func @transform_3(%arg0: i32) -> (i32, i32) {
    %c0_i32 = arith.constant 0 : i32
    %c0_i32_0 = arith.constant 0 : i32
    return %arg0, %c0_i32 : i32, i32
  }
}

</mosaic_0001>

<llo_original>
// kernel: tpu_custom_call.1
$region0: #{tpu_custom_call.1}
  #allocation0 [shape = 'u32[]', space=smem, size = 0x4, offset = 0x4, fixed_abs, tag = 'smem constant byte address 0x4 - core index']
  #allocation1 [shape = 'u32[144,128]{1,0:T(1,128)}', space=vmem, size = 0x12000, scoped, tag = 'internal scratch']
  %s0 = inlined_call_operand.hbm [shape: f32[512,128], index: 0, kind: input, shape index: {}]
  %s1 = inlined_call_operand.hbm [shape: bf16[4,128,128], index: 1, kind: input, shape index: {}]
  %s2 = inlined_call_operand.vmem [shape: f32[4,1,128], index: 2, kind: input, shape index: {}]
  %s3 = inlined_call_operand.hbm [shape: f32[512,128], index: 3, kind: output, shape index: {}]
  %s4 = sld [smem:[#allocation0]]
  $region53: #{tpu_custom_call.1} parent=0
    _
  %s6 = ssub.s32 1, %s4
  %s7 = scalar_select 0, %s6, %s4
  $region1: #{tpu_custom_call.1} parent=0
    #allocation2 [shape = 'u8[262144]{0}', space=vmem, size = 0x40000, scoped, tag = 'input window, operand 0']
    #allocation3 [shape = 's32[2]{0}', space=sflag, size = 0x8, scoped, tag = 'scoped memory for tpu_custom_call.1']
    #allocation4 [shape = 's32[2]{0}', space=sflag, size = 0x8, scoped, tag = 'scoped memory for tpu_custom_call.1']
    #allocation5 [shape = 'u8[131072]{0}', space=vmem, size = 0x20000, scoped, tag = 'input window, operand 1, single buffered']
    #allocation6 [shape = 's32[1]{0}', space=sflag, size = 0x4, scoped, tag = 'scoped memory for tpu_custom_call.1']
    #allocation7 [shape = 'u8[262144]{0}', space=vmem, size = 0x40000, scoped, tag = 'output window, operand 0']
    %8 = vsyncpa [#allocation3], 0
    %s9 = scalar_lea.sflag [#allocation3], 1
    %10 = vsyncpa %s9, 0
    %11 = vsyncpa [#allocation6], 0
    %12 = vsyncpa [#allocation4], 0
    %s13 = scalar_lea.sflag [#allocation4], 1
    %14 = vsyncpa %s13, 0
    loop: start=0, step=1, limit=4
    $region2: #{tpu_custom_call.1} parent=1 // loop_pre_header
      _
    $region3: #{tpu_custom_call.1} parent=1 // loop_header
      %s16 = sphi 0, %s20
      %p17 = scmp.ge.s32.totalorder %s16, 4
      %s26 = sphi 0, %s28
      %s29 = sphi 0, %s26
      %s30 = sphi 0, %s29
      %s46 = sphi 0, %s30
      %s50 = sphi 0, %s50
      %s52 = sphi 0, %s50
      %s53 = sphi 0, %s52
      %s67 = sphi 0, %s53
      %s71 = sphi 0, %s71
      %s73 = sphi 0, %s71
      %s74 = sphi 0, %s73
      %s88 = sphi 0, %s74
      %s94 = sphi 0, %s96
      %s97 = sphi 0, %s94
      %s98 = sphi 0, %s97
      %s114 = sphi 0, %s98
    $region4: #{tpu_custom_call.1} parent=1 // loop_header_branch
      %19 = sbr.rel (%p17) target = $region8
    $region5: #{tpu_custom_call.1} parent=1 // loop_body
      %s21 = ssub.s32 %s16, 1
      %s22 = ssub.s32 %s16, 2
      %s23 = sadd.s32 %s16, 1
      %s24 = ssub.s32 %s16, %s23
      %p25 = scmp.eq.s32.totalorder %s24, 0
      %s27 = sadd.s32 %s26, 1
      %s28 = scalar_select %p25, %s26, %s27
      %p31 = pneg %p25
      %p32 = scmp.eq.s32.totalorder %s16, 1
      %p33 = por %p31, %p32
      %p34 = scmp.ne.s32.totalorder %s26, %s29
      %p35 = scmp.eq.s32.totalorder %s16, 0
      %p36 = por %p34, %p35
      %p37 = scmp.ne.s32.totalorder %s26, %s29
      %p38 = scmp.eq.s32.totalorder %s21, 1
      %p39 = por %p37, %p38
      %p40 = scmp.ne.s32.totalorder %s29, %s30
      %p41 = scmp.eq.s32.totalorder %s21, 0
      %p42 = por %p40, %p41
      %p43 = scmp.ne.s32.totalorder %s29, %s30
      %p44 = scmp.eq.s32.totalorder %s22, 1
      %p45 = por %p43, %p44
      %p47 = scmp.ne.s32.totalorder %s30, %s46
      %p48 = scmp.eq.s32.totalorder %s22, 0
      %p49 = por %p47, %p48
      %s51 = sadd.s32 %s50, 1
      %p54 = scmp.eq.s32.totalorder %s16, 1
      %p55 = scmp.ne.s32.totalorder %s50, %s52
      %p56 = scmp.eq.s32.totalorder %s16, 0
      %p57 = por %p55, %p56
      %p58 = scmp.ne.s32.totalorder %s50, %s52
      %p59 = scmp.eq.s32.totalorder %s21, 1
      %p60 = por %p58, %p59
      %p61 = scmp.ne.s32.totalorder %s52, %s53
      %p62 = scmp.eq.s32.totalorder %s21, 0
      %p63 = por %p61, %p62
      %p64 = scmp.ne.s32.totalorder %s52, %s53
      %p65 = scmp.eq.s32.totalorder %s22, 1
      %p66 = por %p64, %p65
      %p68 = scmp.ne.s32.totalorder %s53, %s67
      %p69 = scmp.eq.s32.totalorder %s22, 0
      %p70 = por %p68, %p69
      %s72 = sadd.s32 %s71, 1
      %p75 = scmp.eq.s32.totalorder %s16, 1
      %p76 = scmp.ne.s32.totalorder %s71, %s73
      %p77 = scmp.eq.s32.totalorder %s16, 0
      %p78 = por %p76, %p77
      %p79 = scmp.ne.s32.totalorder %s71, %s73
      %p80 = scmp.eq.s32.totalorder %s21, 1
      %p81 = por %p79, %p80
      %p82 = scmp.ne.s32.totalorder %s73, %s74
      %p83 = scmp.eq.s32.totalorder %s21, 0
      %p84 = por %p82, %p83
      %p85 = scmp.ne.s32.totalorder %s73, %s74
      %p86 = scmp.eq.s32.totalorder %s22, 1
      %p87 = por %p85, %p86
      %p89 = scmp.ne.s32.totalorder %s74, %s88
      %p90 = scmp.eq.s32.totalorder %s22, 0
      %p91 = por %p89, %p90
      %s92 = ssub.s32 %s16, %s23
      %p93 = scmp.eq.s32.totalorder %s92, 0
      %s95 = sadd.s32 %s94, 1
      %s96 = scalar_select %p93, %s94, %s95
      %p99 = pneg %p93
      %p100 = scmp.eq.s32.totalorder %s16, 1
      %p101 = por %p99, %p100
      %p102 = scmp.ne.s32.totalorder %s94, %s97
      %p103 = scmp.eq.s32.totalorder %s16, 0
      %p104 = por %p102, %p103
      %p105 = scmp.ne.s32.totalorder %s94, %s97
      %p106 = scmp.eq.s32.totalorder %s21, 1
      %p107 = por %p105, %p106
      %p108 = scmp.ne.s32.totalorder %s97, %s98
      %p109 = scmp.eq.s32.totalorder %s21, 0
      %p110 = por %p108, %p109
      %p111 = scmp.ne.s32.totalorder %s97, %s98
      %p112 = scmp.eq.s32.totalorder %s22, 1
      %p113 = por %p111, %p112
      %p115 = scmp.ne.s32.totalorder %s98, %s114
      %p116 = scmp.eq.s32.totalorder %s22, 0
      %p117 = por %p115, %p116
      %p118 = scmp.le.s32.totalorder 1, %s16
      %p119 = scmp.lt.s32.totalorder %s16, 3
      %p120 = pnand %p118, %p119
      %p121 = pneg %p120
      // Predicated region
      $region9: #{tpu_custom_call.1} parent=5 // pred_check
        _
      $region10: #{tpu_custom_call.1} parent=5 // pred_check_branch
        %123 = sbr.rel (%p120) target = $region12
      $region11: #{tpu_custom_call.1} parent=5 // pred_region
        %s124 = ssub.s32 %s16, 1
        // Predicated region
        $region13: #{tpu_custom_call.1} parent=11 // pred_check
          %p125 = pneg %p63
        $region14: #{tpu_custom_call.1} parent=11 // pred_check_branch
          %127 = sbr.rel (%p125) target = $region16
        $region15: #{tpu_custom_call.1} parent=11 // pred_region
          %s129 = ssub.s32 4096, 4096
          %130 = vsyncadd [#allocation6], %s129
          %s131 = sshll.u32 [#allocation5], 4
          %s132 = int_to_ptr.vmem [resolvable:$true] %s131
          %137 = dma.hbm_to_vmem [thread:$0]  %s1, 4096, %s132, [#allocation6], 64, 64, 4
        $region16: #{tpu_custom_call.1} parent=11 // pred_fallthru
          _
        // Predicated region
        $region17: #{tpu_custom_call.1} parent=11 // pred_check
          %p138 = pneg %p84
        $region18: #{tpu_custom_call.1} parent=11 // pred_check_branch
          %140 = sbr.rel (%p138) target = $region20
        $region19: #{tpu_custom_call.1} parent=11 // pred_region
          _
        $region20: #{tpu_custom_call.1} parent=11 // pred_fallthru
          _
      $region12: #{tpu_custom_call.1} parent=5 // pred_fallthru
        _
      %p141 = scmp.lt.s32.totalorder %s16, 2
      // Predicated region
      $region21: #{tpu_custom_call.1} parent=5 // pred_check
        %p142 = pneg %p141
      $region22: #{tpu_custom_call.1} parent=5 // pred_check_branch
        %144 = sbr.rel (%p142) target = $region24
      $region23: #{tpu_custom_call.1} parent=5 // pred_region
        // Predicated region
        $region25: #{tpu_custom_call.1} parent=23 // pred_check
          %p145 = pneg %p36
        $region26: #{tpu_custom_call.1} parent=23 // pred_check_branch
          %147 = sbr.rel (%p145) target = $region28
        $region27: #{tpu_custom_call.1} parent=23 // pred_region
          %s148 = sand.u32 %s26, 1
          %s149 = scalar_lea.sflag [#allocation3], %s148
          %s150 = sand.u32 %s26, 1
          %s151 = smul.addr %s150, 256
          %s152 = scalar_lea.vmem [#allocation2], %s151
          %s153 = smul.u32 32, %s16
          %s155 = ssub.s32 4096, 4096
          %156 = vsyncadd %s149, %s155
          %s157 = smul.addr %s153, 128
          %s158 = scalar_lea.hbm %s0, %s157
          %s159 = sshll.u32 %s152, 4
          %s160 = int_to_ptr.vmem [resolvable:$true] %s159
          %165 = dma.hbm_to_vmem [thread:$0]  %s158, 4096, %s160, %s149, 128, 128, 8
        $region28: #{tpu_custom_call.1} parent=23 // pred_fallthru
          _
      $region24: #{tpu_custom_call.1} parent=5 // pred_fallthru
        _
      %p166 = scmp.le.s32.totalorder 1, %s16
      %p167 = scmp.lt.s32.totalorder %s16, 3
      %p168 = pnand %p166, %p167
      %p169 = pneg %p168
      // Predicated region
      $region29: #{tpu_custom_call.1} parent=5 // pred_check
        _
      $region30: #{tpu_custom_call.1} parent=5 // pred_check_branch
        %171 = sbr.rel (%p168) target = $region32
      $region31: #{tpu_custom_call.1} parent=5 // pred_region
        %s172 = ssub.s32 %s16, 1
        %s173 = sand.u32 %s29, 1
        %s174 = scalar_lea.sflag [#allocation3], %s173
        %s175 = sand.u32 %s29, 1
        %s176 = smul.addr %s175, 256
        %s177 = scalar_lea.vmem [#allocation2], %s176
        // Predicated region
        $region33: #{tpu_custom_call.1} parent=31 // pred_check
          %p178 = pneg %p42
        $region34: #{tpu_custom_call.1} parent=31 // pred_check_branch
          %180 = sbr.rel (%p178) target = $region36
        $region35: #{tpu_custom_call.1} parent=31 // pred_region
          %181 = dma.done %s174, 4096
        $region36: #{tpu_custom_call.1} parent=31 // pred_fallthru
          _
        // Predicated region
        $region37: #{tpu_custom_call.1} parent=31 // pred_check
          %p182 = pneg %p63
        $region38: #{tpu_custom_call.1} parent=31 // pred_check_branch
          %184 = sbr.rel (%p182) target = $region40
        $region39: #{tpu_custom_call.1} parent=31 // pred_region
          %185 = dma.done [#allocation6], 4096
        $region40: #{tpu_custom_call.1} parent=31 // pred_fallthru
          _
        %s186 = sand.u32 %s29, 1
        %s187 = scalar_lea.sflag [#allocation3], %s186
        %s188 = sand.u32 %s29, 1
        %s189 = smul.addr %s188, 256
        %s190 = scalar_lea.vmem [#allocation2], %s189
        %p191 = pneg %p42
        %p192 = pneg %p39
        %p193 = pneg %p63
        %p194 = pneg %p60
        %p195 = pneg %p84
        %p196 = pneg %p81
        %p197 = pneg %p110
        %p198 = pneg %p107
        %s199 = sand.u32 %s97, 1
        %s200 = scalar_lea.sflag [#allocation4], %s199
        %s201 = sand.u32 %s97, 1
        %s202 = smul.addr %s201, 256
        %s203 = scalar_lea.vmem [#allocation7], %s202
        %s204 = smul.u32 32, %s21
        %s205 = smul.u32 32, %s21
        %v207 = vld [vmem:[%s177] sm:$0xff]
        %v208 = vld [vmem:[%s177 + $0x8] sm:$0xff]
        %v209 = vld [vmem:[%s177 + $0x10] sm:$0xff]
        %v210 = vld [vmem:[%s177 + $0x18] sm:$0xff]
        %v211 = vld [vmem:[%s177 + $0x20] sm:$0xff]
        %v212 = vld [vmem:[%s177 + $0x28] sm:$0xff]
        %v213 = vld [vmem:[%s177 + $0x30] sm:$0xff]
        %v214 = vld [vmem:[%s177 + $0x38] sm:$0xff]
        %v215 = vld [vmem:[%s177 + $0x40] sm:$0xff]
        %v216 = vld [vmem:[%s177 + $0x48] sm:$0xff]
        %v217 = vld [vmem:[%s177 + $0x50] sm:$0xff]
        %v218 = vld [vmem:[%s177 + $0x58] sm:$0xff]
        %v219 = vld [vmem:[%s177 + $0x60] sm:$0xff]
        %v220 = vld [vmem:[%s177 + $0x68] sm:$0xff]
        %v221 = vld [vmem:[%s177 + $0x70] sm:$0xff]
        %v222 = vld [vmem:[%s177 + $0x78] sm:$0xff]
        %v223 = vmul.f32 %v207, %v207
        %v224 = vmul.f32 %v208, %v208
        %v225 = vmul.f32 %v209, %v209
        %v226 = vmul.f32 %v210, %v210
        %v227 = vmul.f32 %v211, %v211
        %v228 = vmul.f32 %v212, %v212
        %v229 = vmul.f32 %v213, %v213
        %v230 = vmul.f32 %v214, %v214
        %v231 = vmul.f32 %v215, %v215
        %v232 = vmul.f32 %v216, %v216
        %v233 = vmul.f32 %v217, %v217
        %v234 = vmul.f32 %v218, %v218
        %v235 = vmul.f32 %v219, %v219
        %v236 = vmul.f32 %v220, %v220
        %v237 = vmul.f32 %v221, %v221
        %v238 = vmul.f32 %v222, %v222
        %239 = vadd.xlane.f32.xlu0 %v223
        %v240 = vpop.xlane.xlu0 %239
        %241 = vadd.xlane.f32.xlu0 %v224
        %v242 = vpop.xlane.xlu0 %241
        %243 = vadd.xlane.f32.xlu0 %v225
        %v244 = vpop.xlane.xlu0 %243
        %245 = vadd.xlane.f32.xlu0 %v226
        %v246 = vpop.xlane.xlu0 %245
        %247 = vadd.xlane.f32.xlu0 %v227
        %v248 = vpop.xlane.xlu0 %247
        %249 = vadd.xlane.f32.xlu0 %v228
        %v250 = vpop.xlane.xlu0 %249
        %251 = vadd.xlane.f32.xlu0 %v229
        %v252 = vpop.xlane.xlu0 %251
        %253 = vadd.xlane.f32.xlu0 %v230
        %v254 = vpop.xlane.xlu0 %253
        %255 = vadd.xlane.f32.xlu0 %v231
        %v256 = vpop.xlane.xlu0 %255
        %257 = vadd.xlane.f32.xlu0 %v232
        %v258 = vpop.xlane.xlu0 %257
        %259 = vadd.xlane.f32.xlu0 %v233
        %v260 = vpop.xlane.xlu0 %259
        %261 = vadd.xlane.f32.xlu0 %v234
        %v262 = vpop.xlane.xlu0 %261
        %263 = vadd.xlane.f32.xlu0 %v235
        %v264 = vpop.xlane.xlu0 %263
        %265 = vadd.xlane.f32.xlu0 %v236
        %v266 = vpop.xlane.xlu0 %265
        %267 = vadd.xlane.f32.xlu0 %v237
        %v268 = vpop.xlane.xlu0 %267
        %269 = vadd.xlane.f32.xlu0 %v238
        %v270 = vpop.xlane.xlu0 %269
        %v271 = vrcp.pop 128.0
        %v272 = vmul.f32 %v240, %v271
        %v273 = vmul.f32 %v242, %v271
        %v274 = vmul.f32 %v244, %v271
        %v275 = vmul.f32 %v246, %v271
        %v276 = vmul.f32 %v248, %v271
        %v277 = vmul.f32 %v250, %v271
        %v278 = vmul.f32 %v252, %v271
        %v279 = vmul.f32 %v254, %v271
        %v280 = vmul.f32 %v256, %v271
        %v281 = vmul.f32 %v258, %v271
        %v282 = vmul.f32 %v260, %v271
        %v283 = vmul.f32 %v262, %v271
        %v284 = vmul.f32 %v264, %v271
        %v285 = vmul.f32 %v266, %v271
        %v286 = vmul.f32 %v268, %v271
        %v287 = vmul.f32 %v270, %v271
        %v288 = vadd.f32 %v272, 1e-08
        %v289 = vadd.f32 %v273, 1e-08
        %v290 = vadd.f32 %v274, 1e-08
        %v291 = vadd.f32 %v275, 1e-08
        %v292 = vadd.f32 %v276, 1e-08
        %v293 = vadd.f32 %v277, 1e-08
        %v294 = vadd.f32 %v278, 1e-08
        %v295 = vadd.f32 %v279, 1e-08
        %v296 = vadd.f32 %v280, 1e-08
        %v297 = vadd.f32 %v281, 1e-08
        %v298 = vadd.f32 %v282, 1e-08
        %v299 = vadd.f32 %v283, 1e-08
        %v300 = vadd.f32 %v284, 1e-08
        %v301 = vadd.f32 %v285, 1e-08
        %v302 = vadd.f32 %v286, 1e-08
        %v303 = vadd.f32 %v287, 1e-08
        %v304 = vrsqrt.pop %v288
        %v305 = vrsqrt.pop %v289
        %v306 = vrsqrt.pop %v290
        %v307 = vrsqrt.pop %v291
        %v308 = vrsqrt.pop %v292
        %v309 = vrsqrt.pop %v293
        %v310 = vrsqrt.pop %v294
        %v311 = vrsqrt.pop %v295
        %v312 = vrsqrt.pop %v296
        %v313 = vrsqrt.pop %v297
        %v314 = vrsqrt.pop %v298
        %v315 = vrsqrt.pop %v299
        %v316 = vrsqrt.pop %v300
        %v317 = vrsqrt.pop %v301
        %v318 = vrsqrt.pop %v302
        %v319 = vrsqrt.pop %v303
        %v320 = vmul.f32 %v207, %v304
        %v321 = vmul.f32 %v208, %v305
        %v322 = vmul.f32 %v209, %v306
        %v323 = vmul.f32 %v210, %v307
        %v324 = vmul.f32 %v211, %v308
        %v325 = vmul.f32 %v212, %v309
        %v326 = vmul.f32 %v213, %v310
        %v327 = vmul.f32 %v214, %v311
        %v328 = vmul.f32 %v215, %v312
        %v329 = vmul.f32 %v216, %v313
        %v330 = vmul.f32 %v217, %v314
        %v331 = vmul.f32 %v218, %v315
        %v332 = vmul.f32 %v219, %v316
        %v333 = vmul.f32 %v220, %v317
        %v334 = vmul.f32 %v221, %v318
        %v335 = vmul.f32 %v222, %v319
        %v336 = vpack.c.bf16 %v321, %v320
        %v337 = vpack.c.bf16 %v323, %v322
        %v338 = vpack.c.bf16 %v325, %v324
        %v339 = vpack.c.bf16 %v327, %v326
        %v340 = vpack.c.bf16 %v329, %v328
        %v341 = vpack.c.bf16 %v331, %v330
        %v342 = vpack.c.bf16 %v333, %v332
        %v343 = vpack.c.bf16 %v335, %v334
        %v344 = vld [vmem:[%s177 + $0x80] sm:$0xff]
        %v345 = vld [vmem:[%s177 + $0x88] sm:$0xff]
        %v346 = vld [vmem:[%s177 + $0x90] sm:$0xff]
        %v347 = vld [vmem:[%s177 + $0x98] sm:$0xff]
        %v348 = vld [vmem:[%s177 + $0xa0] sm:$0xff]
        %v349 = vld [vmem:[%s177 + $0xa8] sm:$0xff]
        %v350 = vld [vmem:[%s177 + $0xb0] sm:$0xff]
        %v351 = vld [vmem:[%s177 + $0xb8] sm:$0xff]
        %v352 = vld [vmem:[%s177 + $0xc0] sm:$0xff]
        %v353 = vld [vmem:[%s177 + $0xc8] sm:$0xff]
        %v354 = vld [vmem:[%s177 + $0xd0] sm:$0xff]
        %v355 = vld [vmem:[%s177 + $0xd8] sm:$0xff]
        %v356 = vld [vmem:[%s177 + $0xe0] sm:$0xff]
        %v357 = vld [vmem:[%s177 + $0xe8] sm:$0xff]
        %v358 = vld [vmem:[%s177 + $0xf0] sm:$0xff]
        %v359 = vld [vmem:[%s177 + $0xf8] sm:$0xff]
        %v360 = vmul.f32 %v344, %v344
        %v361 = vmul.f32 %v345, %v345
        %v362 = vmul.f32 %v346, %v346
        %v363 = vmul.f32 %v347, %v347
        %v364 = vmul.f32 %v348, %v348
        %v365 = vmul.f32 %v349, %v349
        %v366 = vmul.f32 %v350, %v350
        %v367 = vmul.f32 %v351, %v351
        %v368 = vmul.f32 %v352, %v352
        %v369 = vmul.f32 %v353, %v353
        %v370 = vmul.f32 %v354, %v354
        %v371 = vmul.f32 %v355, %v355
        %v372 = vmul.f32 %v356, %v356
        %v373 = vmul.f32 %v357, %v357
        %v374 = vmul.f32 %v358, %v358
        %v375 = vmul.f32 %v359, %v359
        %376 = vadd.xlane.f32.xlu0 %v360
        %v377 = vpop.xlane.xlu0 %376
        %378 = vadd.xlane.f32.xlu0 %v361
        %v379 = vpop.xlane.xlu0 %378
        %380 = vadd.xlane.f32.xlu0 %v362
        %v381 = vpop.xlane.xlu0 %380
        %382 = vadd.xlane.f32.xlu0 %v363
        %v383 = vpop.xlane.xlu0 %382
        %384 = vadd.xlane.f32.xlu0 %v364
        %v385 = vpop.xlane.xlu0 %384
        %386 = vadd.xlane.f32.xlu0 %v365
        %v387 = vpop.xlane.xlu0 %386
        %388 = vadd.xlane.f32.xlu0 %v366
        %v389 = vpop.xlane.xlu0 %388
        %390 = vadd.xlane.f32.xlu0 %v367
        %v391 = vpop.xlane.xlu0 %390
        %392 = vadd.xlane.f32.xlu0 %v368
        %v393 = vpop.xlane.xlu0 %392
        %394 = vadd.xlane.f32.xlu0 %v369
        %v395 = vpop.xlane.xlu0 %394
        %396 = vadd.xlane.f32.xlu0 %v370
        %v397 = vpop.xlane.xlu0 %396
        %398 = vadd.xlane.f32.xlu0 %v371
        %v399 = vpop.xlane.xlu0 %398
        %400 = vadd.xlane.f32.xlu0 %v372
        %v401 = vpop.xlane.xlu0 %400
        %402 = vadd.xlane.f32.xlu0 %v373
        %v403 = vpop.xlane.xlu0 %402
        %404 = vadd.xlane.f32.xlu0 %v374
        %v405 = vpop.xlane.xlu0 %404
        %406 = vadd.xlane.f32.xlu0 %v375
        %v407 = vpop.xlane.xlu0 %406
        %v408 = vmul.f32 %v377, %v271
        %v409 = vmul.f32 %v379, %v271
        %v410 = vmul.f32 %v381, %v271
        %v411 = vmul.f32 %v383, %v271
        %v412 = vmul.f32 %v385, %v271
        %v413 = vmul.f32 %v387, %v271
        %v414 = vmul.f32 %v389, %v271
        %v415 = vmul.f32 %v391, %v271
        %v416 = vmul.f32 %v393, %v271
        %v417 = vmul.f32 %v395, %v271
        %v418 = vmul.f32 %v397, %v271
        %v419 = vmul.f32 %v399, %v271
        %v420 = vmul.f32 %v401, %v271
        %v421 = vmul.f32 %v403, %v271
        %v422 = vmul.f32 %v405, %v271
        %v423 = vmul.f32 %v407, %v271
        %v424 = vadd.f32 %v408, 1e-08
        %v425 = vadd.f32 %v409, 1e-08
        %v426 = vadd.f32 %v410, 1e-08
        %v427 = vadd.f32 %v411, 1e-08
        %v428 = vadd.f32 %v412, 1e-08
        %v429 = vadd.f32 %v413, 1e-08
        %v430 = vadd.f32 %v414, 1e-08
        %v431 = vadd.f32 %v415, 1e-08
        %v432 = vadd.f32 %v416, 1e-08
        %v433 = vadd.f32 %v417, 1e-08
        %v434 = vadd.f32 %v418, 1e-08
        %v435 = vadd.f32 %v419, 1e-08
        %v436 = vadd.f32 %v420, 1e-08
        %v437 = vadd.f32 %v421, 1e-08
        %v438 = vadd.f32 %v422, 1e-08
        %v439 = vadd.f32 %v423, 1e-08
        %v440 = vrsqrt.pop %v424
        %v441 = vrsqrt.pop %v425
        %v442 = vrsqrt.pop %v426
        %v443 = vrsqrt.pop %v427
        %v444 = vrsqrt.pop %v428
        %v445 = vrsqrt.pop %v429
        %v446 = vrsqrt.pop %v430
        %v447 = vrsqrt.pop %v431
        %v448 = vrsqrt.pop %v432
        %v449 = vrsqrt.pop %v433
        %v450 = vrsqrt.pop %v434
        %v451 = vrsqrt.pop %v435
        %v452 = vrsqrt.pop %v436
        %v453 = vrsqrt.pop %v437
        %v454 = vrsqrt.pop %v438
        %v455 = vrsqrt.pop %v439
        %v456 = vmul.f32 %v344, %v440
        %v457 = vmul.f32 %v345, %v441
        %v458 = vmul.f32 %v346, %v442
        %v459 = vmul.f32 %v347, %v443
        %v460 = vmul.f32 %v348, %v444
        %v461 = vmul.f32 %v349, %v445
        %v462 = vmul.f32 %v350, %v446
        %v463 = vmul.f32 %v351, %v447
        %v464 = vmul.f32 %v352, %v448
        %v465 = vmul.f32 %v353, %v449
        %v466 = vmul.f32 %v354, %v450
        %v467 = vmul.f32 %v355, %v451
        %v468 = vmul.f32 %v356, %v452
        %v469 = vmul.f32 %v357, %v453
        %v470 = vmul.f32 %v358, %v454
        %v471 = vmul.f32 %v359, %v455
        %v472 = vpack.c.bf16 %v457, %v456
        %v473 = vpack.c.bf16 %v459, %v458
        %v474 = vpack.c.bf16 %v461, %v460
        %v475 = vpack.c.bf16 %v463, %v462
        %v476 = vpack.c.bf16 %v465, %v464
        %v477 = vpack.c.bf16 %v467, %v466
        %v478 = vpack.c.bf16 %v469, %v468
        %v479 = vpack.c.bf16 %v471, %v470
        %v480 = vld [vmem:[#allocation5] sm:$0xf]
        %v481 = vld [vmem:[#allocation5 + $0x4] sm:$0xf]
        %v482 = vld [vmem:[#allocation5 + $0x8] sm:$0xf]
        %v483 = vld [vmem:[#allocation5 + $0xc] sm:$0xf]
        %v484 = vld [vmem:[#allocation5 + $0x10] sm:$0xf]
        %v485 = vld [vmem:[#allocation5 + $0x14] sm:$0xf]
        %v486 = vld [vmem:[#allocation5 + $0x18] sm:$0xf]
        %v487 = vld [vmem:[#allocation5 + $0x1c] sm:$0xf]
        %v488 = vld [vmem:[#allocation5 + $0x20] sm:$0xf]
        %v489 = vld [vmem:[#allocation5 + $0x24] sm:$0xf]
        %v490 = vld [vmem:[#allocation5 + $0x28] sm:$0xf]
        %v491 = vld [vmem:[#allocation5 + $0x2c] sm:$0xf]
        %v492 = vld [vmem:[#allocation5 + $0x30] sm:$0xf]
        %v493 = vld [vmem:[#allocation5 + $0x34] sm:$0xf]
        %v494 = vld [vmem:[#allocation5 + $0x38] sm:$0xf]
        %v495 = vld [vmem:[#allocation5 + $0x3c] sm:$0xf]
        %v496 = vld [vmem:[%s2] sm:$0x1]
        %v498 = vlaneseq
        %v499 = vshrl.u32 %v498, 7
        %v500 = vsub.s32 0, %v499
        %v501 = vrot.slane %v496, %v500
        %v519 = vunpack.c.l.b16 %v480
        %v520 = vunpack.c.l.b16 %v481
        %v521 = vunpack.c.l.b16 %v482
        %v522 = vunpack.c.l.b16 %v483
        %v523 = vunpack.c.l.b16 %v484
        %v524 = vunpack.c.l.b16 %v485
        %v525 = vunpack.c.l.b16 %v486
        %v526 = vunpack.c.l.b16 %v487
        %v527 = vunpack.c.l.b16 %v488
        %v528 = vunpack.c.l.b16 %v489
        %v529 = vunpack.c.l.b16 %v490
        %v530 = vunpack.c.l.b16 %v491
        %v531 = vunpack.c.l.b16 %v492
        %v532 = vunpack.c.l.b16 %v493
        %v533 = vunpack.c.l.b16 %v494
        %v534 = vunpack.c.l.b16 %v495
        %v535 = vpack.c.b16 %v520, %v519
        %v536 = vpack.c.b16 %v522, %v521
        %v537 = vpack.c.b16 %v524, %v523
        %v538 = vpack.c.b16 %v526, %v525
        %v539 = vpack.c.b16 %v528, %v527
        %v540 = vpack.c.b16 %v530, %v529
        %v541 = vpack.c.b16 %v532, %v531
        %v542 = vpack.c.b16 %v534, %v533
        %551 = vmatprep.subr.bf16.mxu0 0
        %552 = vmatpush1.bf16.msra.mxu0 %v535
        %553 = vmatprep.subr.bf16.mxu0 0
        %554 = vmatpush1.bf16.msra.mxu0 %v536
        %555 = vmatprep.subr.bf16.mxu0 0
        %556 = vmatpush1.bf16.msra.mxu0 %v537
        %557 = vmatprep.subr.bf16.mxu0 0
        %558 = vmatpush1.bf16.msra.mxu0 %v538
        %559 = vmatprep.subr.bf16.mxu0 0
        %560 = vmatpush1.bf16.msra.mxu0 %v539
        %561 = vmatprep.subr.bf16.mxu0 0
        %562 = vmatpush1.bf16.msra.mxu0 %v540
        %563 = vmatprep.subr.bf16.mxu0 0
        %564 = vmatpush1.bf16.msra.mxu0 %v541
        %565 = vmatprep.subr.bf16.mxu0 0
        %566 = vmatpush1.bf16.msra.mxu0 %v542
        %567 = vmatprep.subr.bf16.mxu0 0
        %568 = vmatpush1.bf16.msra.mxu0 0
        %569 = vmatprep.subr.bf16.mxu0 0
        %570 = vmatpush1.bf16.msra.mxu0 0
        %571 = vmatprep.subr.bf16.mxu0 0
        %572 = vmatpush1.bf16.msra.mxu0 0
        %573 = vmatprep.subr.bf16.mxu0 0
        %574 = vmatpush1.bf16.msra.mxu0 0
        %575 = vmatprep.subr.bf16.mxu0 0
        %576 = vmatpush1.bf16.msra.mxu0 0
        %577 = vmatprep.subr.bf16.mxu0 0
        %578 = vmatpush1.bf16.msra.mxu0 0
        %579 = vmatprep.subr.bf16.mxu0 0
        %580 = vmatpush1.bf16.msra.mxu0 0
        %581 = vmatprep.subr.bf16.mxu0 0
        %582 = vmatpush1.bf16.msra.mxu0 0
        %583 = vmatprep.mubr.bf16.mxu0 0
        %584 = vmatmul.mubr.bf16.gmra.mrb[0].mxu0 %v336
        %v585 = vpop.f32.mrb[0].mxu0
        %v586 = vadd.f32 %v501, %v585
        %v587 = vpop.f32.mrb[0].mxu0
        %v588 = vpop.f32.mrb[0].mxu0
        %v589 = vadd.f32 %v501, %v588
        %v590 = vpop.f32.mrb[0].mxu0
        %591 = vmatprep.mubr.bf16.mxu0 0
        %592 = vmatmul.mubr.bf16.gmra.mrb[0].mxu0 %v337
        %v593 = vpop.f32.mrb[0].mxu0
        %v594 = vadd.f32 %v501, %v593
        %v595 = vpop.f32.mrb[0].mxu0
        %v596 = vpop.f32.mrb[0].mxu0
        %v597 = vadd.f32 %v501, %v596
        %v598 = vpop.f32.mrb[0].mxu0
        %599 = vmatprep.mubr.bf16.mxu0 0
        %600 = vmatmul.mubr.bf16.gmra.mrb[0].mxu0 %v338
        %v601 = vpop.f32.mrb[0].mxu0
        %v602 = vadd.f32 %v501, %v601
        %v603 = vpop.f32.mrb[0].mxu0
        %v604 = vpop.f32.mrb[0].mxu0
        %v605 = vadd.f32 %v501, %v604
        %v606 = vpop.f32.mrb[0].mxu0
        %607 = vmatprep.mubr.bf16.mxu0 0
        %608 = vmatmul.mubr.bf16.gmra.mrb[0].mxu0 %v339
        %v609 = vpop.f32.mrb[0].mxu0
        %v610 = vadd.f32 %v501, %v609
        %v611 = vpop.f32.mrb[0].mxu0
        %v612 = vpop.f32.mrb[0].mxu0
        %v613 = vadd.f32 %v501, %v612
        %v614 = vpop.f32.mrb[0].mxu0
        %615 = vmatprep.mubr.bf16.mxu0 0
        %616 = vmatmul.mubr.bf16.gmra.mrb[0].mxu0 %v340
        %v617 = vpop.f32.mrb[0].mxu0
        %v618 = vadd.f32 %v501, %v617
        %v619 = vpop.f32.mrb[0].mxu0
        %v620 = vpop.f32.mrb[0].mxu0
        %v621 = vadd.f32 %v501, %v620
        %v622 = vpop.f32.mrb[0].mxu0
        %623 = vmatprep.mubr.bf16.mxu0 0
        %624 = vmatmul.mubr.bf16.gmra.mrb[0].mxu0 %v341
        %v625 = vpop.f32.mrb[0].mxu0
        %v626 = vadd.f32 %v501, %v625
        %v627 = vpop.f32.mrb[0].mxu0
        %v628 = vpop.f32.mrb[0].mxu0
        %v629 = vadd.f32 %v501, %v628
        %v630 = vpop.f32.mrb[0].mxu0
        %631 = vmatprep.mubr.bf16.mxu0 0
        %632 = vmatmul.mubr.bf16.gmra.mrb[0].mxu0 %v342
        %v633 = vpop.f32.mrb[0].mxu0
        %v634 = vadd.f32 %v501, %v633
        %v635 = vpop.f32.mrb[0].mxu0
        %v636 = vpop.f32.mrb[0].mxu0
        %v637 = vadd.f32 %v501, %v636
        %v638 = vpop.f32.mrb[0].mxu0
        %639 = vmatprep.mubr.bf16.mxu0 0
        %640 = vmatmul.mubr.bf16.gmra.mrb[0].mxu0 %v343
        %v641 = vpop.f32.mrb[0].mxu0
        %v642 = vadd.f32 %v501, %v641
        %v643 = vpop.f32.mrb[0].mxu0
        %v644 = vpop.f32.mrb[0].mxu0
        %v645 = vadd.f32 %v501, %v644
        %v646 = vpop.f32.mrb[0].mxu0
        %647 = vdwg.mxu0
        %vm648 = vcmp.ge.f32.partialorder %v586, 0.0
        %vm649 = vcmp.ge.f32.partialorder %v589, 0.0
        %vm650 = vcmp.ge.f32.partialorder %v594, 0.0
        %vm651 = vcmp.ge.f32.partialorder %v597, 0.0
        %vm652 = vcmp.ge.f32.partialorder %v602, 0.0
        %vm653 = vcmp.ge.f32.partialorder %v605, 0.0
        %vm654 = vcmp.ge.f32.partialorder %v610, 0.0
        %vm655 = vcmp.ge.f32.partialorder %v613, 0.0
        %vm656 = vcmp.ge.f32.partialorder %v618, 0.0
        %vm657 = vcmp.ge.f32.partialorder %v621, 0.0
        %vm658 = vcmp.ge.f32.partialorder %v626, 0.0
        %vm659 = vcmp.ge.f32.partialorder %v629, 0.0
        %vm660 = vcmp.ge.f32.partialorder %v634, 0.0
        %vm661 = vcmp.ge.f32.partialorder %v637, 0.0
        %vm662 = vcmp.ge.f32.partialorder %v642, 0.0
        %vm663 = vcmp.ge.f32.partialorder %v645, 0.0
        %v664 = vsel %vm648, 1.4142135, 0.28284273
        %v665 = vsel %vm649, 1.4142135, 0.28284273
        %v666 = vsel %vm650, 1.4142135, 0.28284273
        %v667 = vsel %vm651, 1.4142135, 0.28284273
        %v668 = vsel %vm652, 1.4142135, 0.28284273
        %v669 = vsel %vm653, 1.4142135, 0.28284273
        %v670 = vsel %vm654, 1.4142135, 0.28284273
        %v671 = vsel %vm655, 1.4142135, 0.28284273
        %v672 = vsel %vm656, 1.4142135, 0.28284273
        %v673 = vsel %vm657, 1.4142135, 0.28284273
        %v674 = vsel %vm658, 1.4142135, 0.28284273
        %v675 = vsel %vm659, 1.4142135, 0.28284273
        %v676 = vsel %vm660, 1.4142135, 0.28284273
        %v677 = vsel %vm661, 1.4142135, 0.28284273
        %v678 = vsel %vm662, 1.4142135, 0.28284273
        %v679 = vsel %vm663, 1.4142135, 0.28284273
        %v680 = vmul.f32 %v586, %v664
        %v681 = vmul.f32 %v589, %v665
        %v682 = vmul.f32 %v594, %v666
        %v683 = vmul.f32 %v597, %v667
        %v684 = vmul.f32 %v602, %v668
        %v685 = vmul.f32 %v605, %v669
        %v686 = vmul.f32 %v610, %v670
        %v687 = vmul.f32 %v613, %v671
        %v688 = vmul.f32 %v618, %v672
        %v689 = vmul.f32 %v621, %v673
        %v690 = vmul.f32 %v626, %v674
        %v691 = vmul.f32 %v629, %v675
        %v692 = vmul.f32 %v634, %v676
        %v693 = vmul.f32 %v637, %v677
        %v694 = vmul.f32 %v642, %v678
        %v695 = vmul.f32 %v645, %v679
        %696 = vmatprep.subr.bf16.mxu0 0
        %697 = vmatpush1.bf16.msra.mxu0 %v535
        %698 = vmatprep.subr.bf16.mxu0 0
        %699 = vmatpush1.bf16.msra.mxu0 %v536
        %700 = vmatprep.subr.bf16.mxu0 0
        %701 = vmatpush1.bf16.msra.mxu0 %v537
        %702 = vmatprep.subr.bf16.mxu0 0
        %703 = vmatpush1.bf16.msra.mxu0 %v538
        %704 = vmatprep.subr.bf16.mxu0 0
        %705 = vmatpush1.bf16.msra.mxu0 %v539
        %706 = vmatprep.subr.bf16.mxu0 0
        %707 = vmatpush1.bf16.msra.mxu0 %v540
        %708 = vmatprep.subr.bf16.mxu0 0
        %709 = vmatpush1.bf16.msra.mxu0 %v541
        %710 = vmatprep.subr.bf16.mxu0 0
        %711 = vmatpush1.bf16.msra.mxu0 %v542
        %712 = vmatprep.subr.bf16.mxu0 0
        %713 = vmatpush1.bf16.msra.mxu0 0
        %714 = vmatprep.subr.bf16.mxu0 0
        %715 = vmatpush1.bf16.msra.mxu0 0
        %716 = vmatprep.subr.bf16.mxu0 0
        %717 = vmatpush1.bf16.msra.mxu0 0
        %718 = vmatprep.subr.bf16.mxu0 0
        %719 = vmatpush1.bf16.msra.mxu0 0
        %720 = vmatprep.subr.bf16.mxu0 0
        %721 = vmatpush1.bf16.msra.mxu0 0
        %722 = vmatprep.subr.bf16.mxu0 0
        %723 = vmatpush1.bf16.msra.mxu0 0
        %724 = vmatprep.subr.bf16.mxu0 0
        %725 = vmatpush1.bf16.msra.mxu0 0
        %726 = vmatprep.subr.bf16.mxu0 0
        %727 = vmatpush1.bf16.msra.mxu0 0
        %728 = vmatprep.mubr.bf16.mxu0 0
        %729 = vmatmul.mubr.bf16.gmra.mrb[0].mxu0 %v472
        %v730 = vpop.f32.mrb[0].mxu0
        %v731 = vadd.f32 %v501, %v730
        %v732 = vpop.f32.mrb[0].mxu0
        %v733 = vpop.f32.mrb[0].mxu0
        %v734 = vadd.f32 %v501, %v733
        %v735 = vpop.f32.mrb[0].mxu0
        %736 = vmatprep.mubr.bf16.mxu0 0
        %737 = vmatmul.mubr.bf16.gmra.mrb[0].mxu0 %v473
        %v738 = vpop.f32.mrb[0].mxu0
        %v739 = vadd.f32 %v501, %v738
        %v740 = vpop.f32.mrb[0].mxu0
        %v741 = vpop.f32.mrb[0].mxu0
        %v742 = vadd.f32 %v501, %v741
        %v743 = vpop.f32.mrb[0].mxu0
        %744 = vmatprep.mubr.bf16.mxu0 0
        %745 = vmatmul.mubr.bf16.gmra.mrb[0].mxu0 %v474
        %v746 = vpop.f32.mrb[0].mxu0
        %v747 = vadd.f32 %v501, %v746
        %v748 = vpop.f32.mrb[0].mxu0
        %v749 = vpop.f32.mrb[0].mxu0
        %v750 = vadd.f32 %v501, %v749
        %v751 = vpop.f32.mrb[0].mxu0
        %752 = vmatprep.mubr.bf16.mxu0 0
        %753 = vmatmul.mubr.bf16.gmra.mrb[0].mxu0 %v475
        %v754 = vpop.f32.mrb[0].mxu0
        %v755 = vadd.f32 %v501, %v754
        %v756 = vpop.f32.mrb[0].mxu0
        %v757 = vpop.f32.mrb[0].mxu0
        %v758 = vadd.f32 %v501, %v757
        %v759 = vpop.f32.mrb[0].mxu0
        %760 = vmatprep.mubr.bf16.mxu0 0
        %761 = vmatmul.mubr.bf16.gmra.mrb[0].mxu0 %v476
        %v762 = vpop.f32.mrb[0].mxu0
        %v763 = vadd.f32 %v501, %v762
        %v764 = vpop.f32.mrb[0].mxu0
        %v765 = vpop.f32.mrb[0].mxu0
        %v766 = vadd.f32 %v501, %v765
        %v767 = vpop.f32.mrb[0].mxu0
        %768 = vmatprep.mubr.bf16.mxu0 0
        %769 = vmatmul.mubr.bf16.gmra.mrb[0].mxu0 %v477
        %v770 = vpop.f32.mrb[0].mxu0
        %v771 = vadd.f32 %v501, %v770
        %v772 = vpop.f32.mrb[0].mxu0
        %v773 = vpop.f32.mrb[0].mxu0
        %v774 = vadd.f32 %v501, %v773
        %v775 = vpop.f32.mrb[0].mxu0
        %776 = vmatprep.mubr.bf16.mxu0 0
        %777 = vmatmul.mubr.bf16.gmra.mrb[0].mxu0 %v478
        %v778 = vpop.f32.mrb[0].mxu0
        %v779 = vadd.f32 %v501, %v778
        %v780 = vpop.f32.mrb[0].mxu0
        %v781 = vpop.f32.mrb[0].mxu0
        %v782 = vadd.f32 %v501, %v781
        %v783 = vpop.f32.mrb[0].mxu0
        %784 = vmatprep.mubr.bf16.mxu0 0
        %785 = vmatmul.mubr.bf16.gmra.mrb[0].mxu0 %v479
        %v786 = vpop.f32.mrb[0].mxu0
        %v787 = vadd.f32 %v501, %v786
        %v788 = vpop.f32.mrb[0].mxu0
        %v789 = vpop.f32.mrb[0].mxu0
        %v790 = vadd.f32 %v501, %v789
        %v791 = vpop.f32.mrb[0].mxu0
        %792 = vdwg.mxu0
        %vm793 = vcmp.ge.f32.partialorder %v731, 0.0
        %vm794 = vcmp.ge.f32.partialorder %v734, 0.0
        %vm795 = vcmp.ge.f32.partialorder %v739, 0.0
        %vm796 = vcmp.ge.f32.partialorder %v742, 0.0
        %vm797 = vcmp.ge.f32.partialorder %v747, 0.0
        %vm798 = vcmp.ge.f32.partialorder %v750, 0.0
        %vm799 = vcmp.ge.f32.partialorder %v755, 0.0
        %vm800 = vcmp.ge.f32.partialorder %v758, 0.0
        %vm801 = vcmp.ge.f32.partialorder %v763, 0.0
        %vm802 = vcmp.ge.f32.partialorder %v766, 0.0
        %vm803 = vcmp.ge.f32.partialorder %v771, 0.0
        %vm804 = vcmp.ge.f32.partialorder %v774, 0.0
        %vm805 = vcmp.ge.f32.partialorder %v779, 0.0
        %vm806 = vcmp.ge.f32.partialorder %v782, 0.0
        %vm807 = vcmp.ge.f32.partialorder %v787, 0.0
        %vm808 = vcmp.ge.f32.partialorder %v790, 0.0
        %v809 = vsel %vm793, 1.4142135, 0.28284273
        %v810 = vsel %vm794, 1.4142135, 0.28284273
        %v811 = vsel %vm795, 1.4142135, 0.28284273
        %v812 = vsel %vm796, 1.4142135, 0.28284273
        %v813 = vsel %vm797, 1.4142135, 0.28284273
        %v814 = vsel %vm798, 1.4142135, 0.28284273
        %v815 = vsel %vm799, 1.4142135, 0.28284273
        %v816 = vsel %vm800, 1.4142135, 0.28284273
        %v817 = vsel %vm801, 1.4142135, 0.28284273
        %v818 = vsel %vm802, 1.4142135, 0.28284273
        %v819 = vsel %vm803, 1.4142135, 0.28284273
        %v820 = vsel %vm804, 1.4142135, 0.28284273
        %v821 = vsel %vm805, 1.4142135, 0.28284273
        %v822 = vsel %vm806, 1.4142135, 0.28284273
        %v823 = vsel %vm807, 1.4142135, 0.28284273
        %v824 = vsel %vm808, 1.4142135, 0.28284273
        %v825 = vmul.f32 %v731, %v809
        %v826 = vmul.f32 %v734, %v810
        %v827 = vmul.f32 %v739, %v811
        %v828 = vmul.f32 %v742, %v812
        %v829 = vmul.f32 %v747, %v813
        %v830 = vmul.f32 %v750, %v814
        %v831 = vmul.f32 %v755, %v815
        %v832 = vmul.f32 %v758, %v816
        %v833 = vmul.f32 %v763, %v817
        %v834 = vmul.f32 %v766, %v818
        %v835 = vmul.f32 %v771, %v819
        %v836 = vmul.f32 %v774, %v820
        %v837 = vmul.f32 %v779, %v821
        %v838 = vmul.f32 %v782, %v822
        %v839 = vmul.f32 %v787, %v823
        %v840 = vmul.f32 %v790, %v824
        %v841 = vpack.c.bf16 %v681, %v680
        %v842 = vpack.c.bf16 %v683, %v682
        %v843 = vpack.c.bf16 %v685, %v684
        %v844 = vpack.c.bf16 %v687, %v686
        %v845 = vpack.c.bf16 %v689, %v688
        %v846 = vpack.c.bf16 %v691, %v690
        %v847 = vpack.c.bf16 %v693, %v692
        %v848 = vpack.c.bf16 %v695, %v694
        %v849 = vpack.c.bf16 %v826, %v825
        %v850 = vpack.c.bf16 %v828, %v827
        %v851 = vpack.c.bf16 %v830, %v829
        %v852 = vpack.c.bf16 %v832, %v831
        %v853 = vpack.c.bf16 %v834, %v833
        %v854 = vpack.c.bf16 %v836, %v835
        %v855 = vpack.c.bf16 %v838, %v837
        %v856 = vpack.c.bf16 %v840, %v839
        %s857 = scalar_lea.vmem [#allocation5], 64
        %v858 = vld [vmem:[%s857] sm:$0xf]
        %v859 = vld [vmem:[%s857 + $0x4] sm:$0xf]
        %v860 = vld [vmem:[%s857 + $0x8] sm:$0xf]
        %v861 = vld [vmem:[%s857 + $0xc] sm:$0xf]
        %v862 = vld [vmem:[%s857 + $0x10] sm:$0xf]
        %v863 = vld [vmem:[%s857 + $0x14] sm:$0xf]
        %v864 = vld [vmem:[%s857 + $0x18] sm:$0xf]
        %v865 = vld [vmem:[%s857 + $0x1c] sm:$0xf]
        %v866 = vld [vmem:[%s857 + $0x20] sm:$0xf]
        %v867 = vld [vmem:[%s857 + $0x24] sm:$0xf]
        %v868 = vld [vmem:[%s857 + $0x28] sm:$0xf]
        %v869 = vld [vmem:[%s857 + $0x2c] sm:$0xf]
        %v870 = vld [vmem:[%s857 + $0x30] sm:$0xf]
        %v871 = vld [vmem:[%s857 + $0x34] sm:$0xf]
        %v872 = vld [vmem:[%s857 + $0x38] sm:$0xf]
        %v873 = vld [vmem:[%s857 + $0x3c] sm:$0xf]
        %s874 = scalar_lea.vmem %s2, 1
        %v875 = vld [vmem:[%s874] sm:$0x1]
        %v877 = vlaneseq
        %v878 = vshrl.u32 %v877, 7
        %v879 = vsub.s32 0, %v878
        %v880 = vrot.slane %v875, %v879
        %v898 = vunpack.c.l.b16 %v858
        %v899 = vunpack.c.l.b16 %v859
        %v900 = vunpack.c.l.b16 %v860
        %v901 = vunpack.c.l.b16 %v861
        %v902 = vunpack.c.l.b16 %v862
        %v903 = vunpack.c.l.b16 %v863
        %v904 = vunpack.c.l.b16 %v864
        %v905 = vunpack.c.l.b16 %v865
        %v906 = vunpack.c.l.b16 %v866
        %v907 = vunpack.c.l.b16 %v867
        %v908 = vunpack.c.l.b16 %v868
        %v909 = vunpack.c.l.b16 %v869
        %v910 = vunpack.c.l.b16 %v870
        %v911 = vunpack.c.l.b16 %v871
        %v912 = vunpack.c.l.b16 %v872
        %v913 = vunpack.c.l.b16 %v873
        %v914 = vpack.c.b16 %v899, %v898
        %v915 = vpack.c.b16 %v901, %v900
        %v916 = vpack.c.b16 %v903, %v902
        %v917 = vpack.c.b16 %v905, %v904
        %v918 = vpack.c.b16 %v907, %v906
        %v919 = vpack.c.b16 %v909, %v908
        %v920 = vpack.c.b16 %v911, %v910
        %v921 = vpack.c.b16 %v913, %v912
        %930 = vmatprep.subr.bf16.mxu0 0
        %931 = vmatpush1.bf16.msra.mxu0 %v914
        %932 = vmatprep.subr.bf16.mxu0 0
        %933 = vmatpush1.bf16.msra.mxu0 %v915
        %934 = vmatprep.subr.bf16.mxu0 0
        %935 = vmatpush1.bf16.msra.mxu0 %v916
        %936 = vmatprep.subr.bf16.mxu0 0
        %937 = vmatpush1.bf16.msra.mxu0 %v917
        %938 = vmatprep.subr.bf16.mxu0 0
        %939 = vmatpush1.bf16.msra.mxu0 %v918
        %940 = vmatprep.subr.bf16.mxu0 0
        %941 = vmatpush1.bf16.msra.mxu0 %v919
        %942 = vmatprep.subr.bf16.mxu0 0
        %943 = vmatpush1.bf16.msra.mxu0 %v920
        %944 = vmatprep.subr.bf16.mxu0 0
        %945 = vmatpush1.bf16.msra.mxu0 %v921
        %946 = vmatprep.subr.bf16.mxu0 0
        %947 = vmatpush1.bf16.msra.mxu0 0
        %948 = vmatprep.subr.bf16.mxu0 0
        %949 = vmatpush1.bf16.msra.mxu0 0
        %950 = vmatprep.subr.bf16.mxu0 0
        %951 = vmatpush1.bf16.msra.mxu0 0
        %952 = vmatprep.subr.bf16.mxu0 0
        %953 = vmatpush1.bf16.msra.mxu0 0
        %954 = vmatprep.subr.bf16.mxu0 0
        %955 = vmatpush1.bf16.msra.mxu0 0
        %956 = vmatprep.subr.bf16.mxu0 0
        %957 = vmatpush1.bf16.msra.mxu0 0
        %958 = vmatprep.subr.bf16.mxu0 0
        %959 = vmatpush1.bf16.msra.mxu0 0
        %960 = vmatprep.subr.bf16.mxu0 0
        %961 = vmatpush1.bf16.msra.mxu0 0
        %962 = vmatprep.mubr.bf16.mxu0 0
        %963 = vmatmul.mubr.bf16.gmra.mrb[0].mxu0 %v841
        %v964 = vpop.f32.mrb[0].mxu0
        %v965 = vadd.f32 %v880, %v964
        %v966 = vpop.f32.mrb[0].mxu0
        %v967 = vpop.f32.mrb[0].mxu0
        %v968 = vadd.f32 %v880, %v967
        %v969 = vpop.f32.mrb[0].mxu0
        %970 = vmatprep.mubr.bf16.mxu0 0
        %971 = vmatmul.mubr.bf16.gmra.mrb[0].mxu0 %v842
        %v972 = vpop.f32.mrb[0].mxu0
        %v973 = vadd.f32 %v880, %v972
        %v974 = vpop.f32.mrb[0].mxu0
        %v975 = vpop.f32.mrb[0].mxu0
        %v976 = vadd.f32 %v880, %v975
        %v977 = vpop.f32.mrb[0].mxu0
        %978 = vmatprep.mubr.bf16.mxu0 0
        %979 = vmatmul.mubr.bf16.gmra.mrb[0].mxu0 %v843
        %v980 = vpop.f32.mrb[0].mxu0
        %v981 = vadd.f32 %v880, %v980
        %v982 = vpop.f32.mrb[0].mxu0
        %v983 = vpop.f32.mrb[0].mxu0
        %v984 = vadd.f32 %v880, %v983
        %v985 = vpop.f32.mrb[0].mxu0
        %986 = vmatprep.mubr.bf16.mxu0 0
        %987 = vmatmul.mubr.bf16.gmra.mrb[0].mxu0 %v844
        %v988 = vpop.f32.mrb[0].mxu0
        %v989 = vadd.f32 %v880, %v988
        %v990 = vpop.f32.mrb[0].mxu0
        %v991 = vpop.f32.mrb[0].mxu0
        %v992 = vadd.f32 %v880, %v991
        %v993 = vpop.f32.mrb[0].mxu0
        %994 = vmatprep.mubr.bf16.mxu0 0
        %995 = vmatmul.mubr.bf16.gmra.mrb[0].mxu0 %v845
        %v996 = vpop.f32.mrb[0].mxu0
        %v997 = vadd.f32 %v880, %v996
        %v998 = vpop.f32.mrb[0].mxu0
        %v999 = vpop.f32.mrb[0].mxu0
        %v1000 = vadd.f32 %v880, %v999
        %v1001 = vpop.f32.mrb[0].mxu0
        %1002 = vmatprep.mubr.bf16.mxu0 0
        %1003 = vmatmul.mubr.bf16.gmra.mrb[0].mxu0 %v846
        %v1004 = vpop.f32.mrb[0].mxu0
        %v1005 = vadd.f32 %v880, %v1004
        %v1006 = vpop.f32.mrb[0].mxu0
        %v1007 = vpop.f32.mrb[0].mxu0
        %v1008 = vadd.f32 %v880, %v1007
        %v1009 = vpop.f32.mrb[0].mxu0
        %1010 = vmatprep.mubr.bf16.mxu0 0
        %1011 = vmatmul.mubr.bf16.gmra.mrb[0].mxu0 %v847
        %v1012 = vpop.f32.mrb[0].mxu0
        %v1013 = vadd.f32 %v880, %v1012
        %v1014 = vpop.f32.mrb[0].mxu0
        %v1015 = vpop.f32.mrb[0].mxu0
        %v1016 = vadd.f32 %v880, %v1015
        %v1017 = vpop.f32.mrb[0].mxu0
        %1018 = vmatprep.mubr.bf16.mxu0 0
        %1019 = vmatmul.mubr.bf16.gmra.mrb[0].mxu0 %v848
        %v1020 = vpop.f32.mrb[0].mxu0
        %v1021 = vadd.f32 %v880, %v1020
        %v1022 = vpop.f32.mrb[0].mxu0
        %v1023 = vpop.f32.mrb[0].mxu0
        %v1024 = vadd.f32 %v880, %v1023
        %v1025 = vpop.f32.mrb[0].mxu0
        %1026 = vdwg.mxu0
        %vm1027 = vcmp.ge.f32.partialorder %v965, 0.0
        %vm1028 = vcmp.ge.f32.partialorder %v968, 0.0
        %vm1029 = vcmp.ge.f32.partialorder %v973, 0.0
        %vm1030 = vcmp.ge.f32.partialorder %v976, 0.0
        %vm1031 = vcmp.ge.f32.partialorder %v981, 0.0
        %vm1032 = vcmp.ge.f32.partialorder %v984, 0.0
        %vm1033 = vcmp.ge.f32.partialorder %v989, 0.0
        %vm1034 = vcmp.ge.f32.partialorder %v992, 0.0
        %vm1035 = vcmp.ge.f32.partialorder %v997, 0.0
        %vm1036 = vcmp.ge.f32.partialorder %v1000, 0.0
        %vm1037 = vcmp.ge.f32.partialorder %v1005, 0.0
        %vm1038 = vcmp.ge.f32.partialorder %v1008, 0.0
        %vm1039 = vcmp.ge.f32.partialorder %v1013, 0.0
        %vm1040 = vcmp.ge.f32.partialorder %v1016, 0.0
        %vm1041 = vcmp.ge.f32.partialorder %v1021, 0.0
        %vm1042 = vcmp.ge.f32.partialorder %v1024, 0.0
        %v1043 = vsel %vm1027, 1.4142135, 0.28284273
        %v1044 = vsel %vm1028, 1.4142135, 0.28284273
        %v1045 = vsel %vm1029, 1.4142135, 0.28284273
        %v1046 = vsel %vm1030, 1.4142135, 0.28284273
        %v1047 = vsel %vm1031, 1.4142135, 0.28284273
        %v1048 = vsel %vm1032, 1.4142135, 0.28284273
        %v1049 = vsel %vm1033, 1.4142135, 0.28284273
        %v1050 = vsel %vm1034, 1.4142135, 0.28284273
        %v1051 = vsel %vm1035, 1.4142135, 0.28284273
        %v1052 = vsel %vm1036, 1.4142135, 0.28284273
        %v1053 = vsel %vm1037, 1.4142135, 0.28284273
        %v1054 = vsel %vm1038, 1.4142135, 0.28284273
        %v1055 = vsel %vm1039, 1.4142135, 0.28284273
        %v1056 = vsel %vm1040, 1.4142135, 0.28284273
        %v1057 = vsel %vm1041, 1.4142135, 0.28284273
        %v1058 = vsel %vm1042, 1.4142135, 0.28284273
        %v1059 = vmul.f32 %v965, %v1043
        %v1060 = vmul.f32 %v968, %v1044
        %v1061 = vmul.f32 %v973, %v1045
        %v1062 = vmul.f32 %v976, %v1046
        %v1063 = vmul.f32 %v981, %v1047
        %v1064 = vmul.f32 %v984, %v1048
        %v1065 = vmul.f32 %v989, %v1049
        %v1066 = vmul.f32 %v992, %v1050
        %v1067 = vmul.f32 %v997, %v1051
        %v1068 = vmul.f32 %v1000, %v1052
        %v1069 = vmul.f32 %v1005, %v1053
        %v1070 = vmul.f32 %v1008, %v1054
        %v1071 = vmul.f32 %v1013, %v1055
        %v1072 = vmul.f32 %v1016, %v1056
        %v1073 = vmul.f32 %v1021, %v1057
        %v1074 = vmul.f32 %v1024, %v1058
        %1075 = vmatprep.subr.bf16.mxu0 0
        %1076 = vmatpush1.bf16.msra.mxu0 %v914
        %1077 = vmatprep.subr.bf16.mxu0 0
        %1078 = vmatpush1.bf16.msra.mxu0 %v915
        %1079 = vmatprep.subr.bf16.mxu0 0
        %1080 = vmatpush1.bf16.msra.mxu0 %v916
        %1081 = vmatprep.subr.bf16.mxu0 0
        %1082 = vmatpush1.bf16.msra.mxu0 %v917
        %1083 = vmatprep.subr.bf16.mxu0 0
        %1084 = vmatpush1.bf16.msra.mxu0 %v918
        %1085 = vmatprep.subr.bf16.mxu0 0
        %1086 = vmatpush1.bf16.msra.mxu0 %v919
        %1087 = vmatprep.subr.bf16.mxu0 0
        %1088 = vmatpush1.bf16.msra.mxu0 %v920
        %1089 = vmatprep.subr.bf16.mxu0 0
        %1090 = vmatpush1.bf16.msra.mxu0 %v921
        %1091 = vmatprep.subr.bf16.mxu0 0
        %1092 = vmatpush1.bf16.msra.mxu0 0
        %1093 = vmatprep.subr.bf16.mxu0 0
        %1094 = vmatpush1.bf16.msra.mxu0 0
        %1095 = vmatprep.subr.bf16.mxu0 0
        %1096 = vmatpush1.bf16.msra.mxu0 0
        %1097 = vmatprep.subr.bf16.mxu0 0
        %1098 = vmatpush1.bf16.msra.mxu0 0
        %1099 = vmatprep.subr.bf16.mxu0 0
        %1100 = vmatpush1.bf16.msra.mxu0 0
        %1101 = vmatprep.subr.bf16.mxu0 0
        %1102 = vmatpush1.bf16.msra.mxu0 0
        %1103 = vmatprep.subr.bf16.mxu0 0
        %1104 = vmatpush1.bf16.msra.mxu0 0
        %1105 = vmatprep.subr.bf16.mxu0 0
        %1106 = vmatpush1.bf16.msra.mxu0 0
        %1107 = vmatprep.mubr.bf16.mxu0 0
        %1108 = vmatmul.mubr.bf16.gmra.mrb[0].mxu0 %v849
        %v1109 = vpop.f32.mrb[0].mxu0
        %v1110 = vadd.f32 %v880, %v1109
        %v1111 = vpop.f32.mrb[0].mxu0
        %v1112 = vpop.f32.mrb[0].mxu0
        %v1113 = vadd.f32 %v880, %v1112
        %v1114 = vpop.f32.mrb[0].mxu0
        %1115 = vmatprep.mubr.bf16.mxu0 0
        %1116 = vmatmul.mubr.bf16.gmra.mrb[0].mxu0 %v850
        %v1117 = vpop.f32.mrb[0].mxu0
        %v1118 = vadd.f32 %v880, %v1117
        %v1119 = vpop.f32.mrb[0].mxu0
        %v1120 = vpop.f32.mrb[0].mxu0
        %v1121 = vadd.f32 %v880, %v1120
        %v1122 = vpop.f32.mrb[0].mxu0
        %1123 = vmatprep.mubr.bf16.mxu0 0
        %1124 = vmatmul.mubr.bf16.gmra.mrb[0].mxu0 %v851
        %v1125 = vpop.f32.mrb[0].mxu0
        %v1126 = vadd.f32 %v880, %v1125
        %v1127 = vpop.f32.mrb[0].mxu0
        %v1128 = vpop.f32.mrb[0].mxu0
        %v1129 = vadd.f32 %v880, %v1128
        %v1130 = vpop.f32.mrb[0].mxu0
        %1131 = vmatprep.mubr.bf16.mxu0 0
        %1132 = vmatmul.mubr.bf16.gmra.mrb[0].mxu0 %v852
        %v1133 = vpop.f32.mrb[0].mxu0
        %v1134 = vadd.f32 %v880, %v1133
        %v1135 = vpop.f32.mrb[0].mxu0
        %v1136 = vpop.f32.mrb[0].mxu0
        %v1137 = vadd.f32 %v880, %v1136
        %v1138 = vpop.f32.mrb[0].mxu0
        %1139 = vmatprep.mubr.bf16.mxu0 0
        %1140 = vmatmul.mubr.bf16.gmra.mrb[0].mxu0 %v853
        %v1141 = vpop.f32.mrb[0].mxu0
        %v1142 = vadd.f32 %v880, %v1141
        %v1143 = vpop.f32.mrb[0].mxu0
        %v1144 = vpop.f32.mrb[0].mxu0
        %v1145 = vadd.f32 %v880, %v1144
        %v1146 = vpop.f32.mrb[0].mxu0
        %1147 = vmatprep.mubr.bf16.mxu0 0
        %1148 = vmatmul.mubr.bf16.gmra.mrb[0].mxu0 %v854
        %v1149 = vpop.f32.mrb[0].mxu0
        %v1150 = vadd.f32 %v880, %v1149
        %v1151 = vpop.f32.mrb[0].mxu0
        %v1152 = vpop.f32.mrb[0].mxu0
        %v1153 = vadd.f32 %v880, %v1152
        %v1154 = vpop.f32.mrb[0].mxu0
        %1155 = vmatprep.mubr.bf16.mxu0 0
        %1156 = vmatmul.mubr.bf16.gmra.mrb[0].mxu0 %v855
        %v1157 = vpop.f32.mrb[0].mxu0
        %v1158 = vadd.f32 %v880, %v1157
        %v1159 = vpop.f32.mrb[0].mxu0
        %v1160 = vpop.f32.mrb[0].mxu0
        %v1161 = vadd.f32 %v880, %v1160
        %v1162 = vpop.f32.mrb[0].mxu0
        %1163 = vmatprep.mubr.bf16.mxu0 0
        %1164 = vmatmul.mubr.bf16.gmra.mrb[0].mxu0 %v856
        %v1165 = vpop.f32.mrb[0].mxu0
        %v1166 = vadd.f32 %v880, %v1165
        %v1167 = vpop.f32.mrb[0].mxu0
        %v1168 = vpop.f32.mrb[0].mxu0
        %v1169 = vadd.f32 %v880, %v1168
        %v1170 = vpop.f32.mrb[0].mxu0
        %1171 = vdwg.mxu0
        %vm1172 = vcmp.ge.f32.partialorder %v1110, 0.0
        %vm1173 = vcmp.ge.f32.partialorder %v1113, 0.0
        %vm1174 = vcmp.ge.f32.partialorder %v1118, 0.0
        %vm1175 = vcmp.ge.f32.partialorder %v1121, 0.0
        %vm1176 = vcmp.ge.f32.partialorder %v1126, 0.0
        %vm1177 = vcmp.ge.f32.partialorder %v1129, 0.0
        %vm1178 = vcmp.ge.f32.partialorder %v1134, 0.0
        %vm1179 = vcmp.ge.f32.partialorder %v1137, 0.0
        %vm1180 = vcmp.ge.f32.partialorder %v1142, 0.0
        %vm1181 = vcmp.ge.f32.partialorder %v1145, 0.0
        %vm1182 = vcmp.ge.f32.partialorder %v1150, 0.0
        %vm1183 = vcmp.ge.f32.partialorder %v1153, 0.0
        %vm1184 = vcmp.ge.f32.partialorder %v1158, 0.0
        %vm1185 = vcmp.ge.f32.partialorder %v1161, 0.0
        %vm1186 = vcmp.ge.f32.partialorder %v1166, 0.0
        %vm1187 = vcmp.ge.f32.partialorder %v1169, 0.0
        %v1188 = vsel %vm1172, 1.4142135, 0.28284273
        %v1189 = vsel %vm1173, 1.4142135, 0.28284273
        %v1190 = vsel %vm1174, 1.4142135, 0.28284273
        %v1191 = vsel %vm1175, 1.4142135, 0.28284273
        %v1192 = vsel %vm1176, 1.4142135, 0.28284273
        %v1193 = vsel %vm1177, 1.4142135, 0.28284273
        %v1194 = vsel %vm1178, 1.4142135, 0.28284273
        %v1195 = vsel %vm1179, 1.4142135, 0.28284273
        %v1196 = vsel %vm1180, 1.4142135, 0.28284273
        %v1197 = vsel %vm1181, 1.4142135, 0.28284273
        %v1198 = vsel %vm1182, 1.4142135, 0.28284273
        %v1199 = vsel %vm1183, 1.4142135, 0.28284273
        %v1200 = vsel %vm1184, 1.4142135, 0.28284273
        %v1201 = vsel %vm1185, 1.4142135, 0.28284273
        %v1202 = vsel %vm1186, 1.4142135, 0.28284273
        %v1203 = vsel %vm1187, 1.4142135, 0.28284273
        %v1204 = vmul.f32 %v1110, %v1188
        %v1205 = vmul.f32 %v1113, %v1189
        %v1206 = vmul.f32 %v1118, %v1190
        %v1207 = vmul.f32 %v1121, %v1191
        %v1208 = vmul.f32 %v1126, %v1192
        %v1209 = vmul.f32 %v1129, %v1193
        %v1210 = vmul.f32 %v1134, %v1194
        %v1211 = vmul.f32 %v1137, %v1195
        %v1212 = vmul.f32 %v1142, %v1196
        %v1213 = vmul.f32 %v1145, %v1197
        %v1214 = vmul.f32 %v1150, %v1198
        %v1215 = vmul.f32 %v1153, %v1199
        %v1216 = vmul.f32 %v1158, %v1200
        %v1217 = vmul.f32 %v1161, %v1201
        %v1218 = vmul.f32 %v1166, %v1202
        %v1219 = vmul.f32 %v1169, %v1203
        %v1220 = vpack.c.bf16 %v1060, %v1059
        %v1221 = vpack.c.bf16 %v1062, %v1061
        %v1222 = vpack.c.bf16 %v1064, %v1063
        %v1223 = vpack.c.bf16 %v1066, %v1065
        %v1224 = vpack.c.bf16 %v1068, %v1067
        %v1225 = vpack.c.bf16 %v1070, %v1069
        %v1226 = vpack.c.bf16 %v1072, %v1071
        %v1227 = vpack.c.bf16 %v1074, %v1073
        %v1228 = vpack.c.bf16 %v1205, %v1204
        %v1229 = vpack.c.bf16 %v1207, %v1206
        %v1230 = vpack.c.bf16 %v1209, %v1208
        %v1231 = vpack.c.bf16 %v1211, %v1210
        %v1232 = vpack.c.bf16 %v1213, %v1212
        %v1233 = vpack.c.bf16 %v1215, %v1214
        %v1234 = vpack.c.bf16 %v1217, %v1216
        %v1235 = vpack.c.bf16 %v1219, %v1218
        %s1236 = scalar_lea.vmem [#allocation5], 128
        %v1237 = vld [vmem:[%s1236] sm:$0xf]
        %v1238 = vld [vmem:[%s1236 + $0x4] sm:$0xf]
        %v1239 = vld [vmem:[%s1236 + $0x8] sm:$0xf]
        %v1240 = vld [vmem:[%s1236 + $0xc] sm:$0xf]
        %v1241 = vld [vmem:[%s1236 + $0x10] sm:$0xf]
        %v1242 = vld [vmem:[%s1236 + $0x14] sm:$0xf]
        %v1243 = vld [vmem:[%s1236 + $0x18] sm:$0xf]
        %v1244 = vld [vmem:[%s1236 + $0x1c] sm:$0xf]
        %v1245 = vld [vmem:[%s1236 + $0x20] sm:$0xf]
        %v1246 = vld [vmem:[%s1236 + $0x24] sm:$0xf]
        %v1247 = vld [vmem:[%s1236 + $0x28] sm:$0xf]
        %v1248 = vld [vmem:[%s1236 + $0x2c] sm:$0xf]
        %v1249 = vld [vmem:[%s1236 + $0x30] sm:$0xf]
        %v1250 = vld [vmem:[%s1236 + $0x34] sm:$0xf]
        %v1251 = vld [vmem:[%s1236 + $0x38] sm:$0xf]
        %v1252 = vld [vmem:[%s1236 + $0x3c] sm:$0xf]
        %s1253 = scalar_lea.vmem %s2, 2
        %v1254 = vld [vmem:[%s1253] sm:$0x1]
        %v1256 = vlaneseq
        %v1257 = vshrl.u32 %v1256, 7
        %v1258 = vsub.s32 0, %v1257
        %v1259 = vrot.slane %v1254, %v1258
        %v1277 = vunpack.c.l.b16 %v1237
        %v1278 = vunpack.c.l.b16 %v1238
        %v1279 = vunpack.c.l.b16 %v1239
        %v1280 = vunpack.c.l.b16 %v1240
        %v1281 = vunpack.c.l.b16 %v1241
        %v1282 = vunpack.c.l.b16 %v1242
        %v1283 = vunpack.c.l.b16 %v1243
        %v1284 = vunpack.c.l.b16 %v1244
        %v1285 = vunpack.c.l.b16 %v1245
        %v1286 = vunpack.c.l.b16 %v1246
        %v1287 = vunpack.c.l.b16 %v1247
        %v1288 = vunpack.c.l.b16 %v1248
        %v1289 = vunpack.c.l.b16 %v1249
        %v1290 = vunpack.c.l.b16 %v1250
        %v1291 = vunpack.c.l.b16 %v1251
        %v1292 = vunpack.c.l.b16 %v1252
        %v1293 = vpack.c.b16 %v1278, %v1277
        %v1294 = vpack.c.b16 %v1280, %v1279
        %v1295 = vpack.c.b16 %v1282, %v1281
        %v1296 = vpack.c.b16 %v1284, %v1283
        %v1297 = vpack.c.b16 %v1286, %v1285
        %v1298 = vpack.c.b16 %v1288, %v1287
        %v1299 = vpack.c.b16 %v1290, %v1289
        %v1300 = vpack.c.b16 %v1292, %v1291
        %1309 = vmatprep.subr.bf16.mxu0 0
        %1310 = vmatpush1.bf16.msra.mxu0 %v1293
        %1311 = vmatprep.subr.bf16.mxu0 0
        %1312 = vmatpush1.bf16.msra.mxu0 %v1294
        %1313 = vmatprep.subr.bf16.mxu0 0
        %1314 = vmatpush1.bf16.msra.mxu0 %v1295
        %1315 = vmatprep.subr.bf16.mxu0 0
        %1316 = vmatpush1.bf16.msra.mxu0 %v1296
        %1317 = vmatprep.subr.bf16.mxu0 0
        %1318 = vmatpush1.bf16.msra.mxu0 %v1297
        %1319 = vmatprep.subr.bf16.mxu0 0
        %1320 = vmatpush1.bf16.msra.mxu0 %v1298
        %1321 = vmatprep.subr.bf16.mxu0 0
        %1322 = vmatpush1.bf16.msra.mxu0 %v1299
        %1323 = vmatprep.subr.bf16.mxu0 0
        %1324 = vmatpush1.bf16.msra.mxu0 %v1300
        %1325 = vmatprep.subr.bf16.mxu0 0
        %1326 = vmatpush1.bf16.msra.mxu0 0
        %1327 = vmatprep.subr.bf16.mxu0 0
        %1328 = vmatpush1.bf16.msra.mxu0 0
        %1329 = vmatprep.subr.bf16.mxu0 0
        %1330 = vmatpush1.bf16.msra.mxu0 0
        %1331 = vmatprep.subr.bf16.mxu0 0
        %1332 = vmatpush1.bf16.msra.mxu0 0
        %1333 = vmatprep.subr.bf16.mxu0 0
        %1334 = vmatpush1.bf16.msra.mxu0 0
        %1335 = vmatprep.subr.bf16.mxu0 0
        %1336 = vmatpush1.bf16.msra.mxu0 0
        %1337 = vmatprep.subr.bf16.mxu0 0
        %1338 = vmatpush1.bf16.msra.mxu0 0
        %1339 = vmatprep.subr.bf16.mxu0 0
        %1340 = vmatpush1.bf16.msra.mxu0 0
        %1341 = vmatprep.mubr.bf16.mxu0 0
        %1342 = vmatmul.mubr.bf16.gmra.mrb[0].mxu0 %v1220
        %v1343 = vpop.f32.mrb[0].mxu0
        %v1344 = vadd.f32 %v1259, %v1343
        %v1345 = vpop.f32.mrb[0].mxu0
        %v1346 = vpop.f32.mrb[0].mxu0
        %v1347 = vadd.f32 %v1259, %v1346
        %v1348 = vpop.f32.mrb[0].mxu0
        %1349 = vmatprep.mubr.bf16.mxu0 0
        %1350 = vmatmul.mubr.bf16.gmra.mrb[0].mxu0 %v1221
        %v1351 = vpop.f32.mrb[0].mxu0
        %v1352 = vadd.f32 %v1259, %v1351
        %v1353 = vpop.f32.mrb[0].mxu0
        %v1354 = vpop.f32.mrb[0].mxu0
        %v1355 = vadd.f32 %v1259, %v1354
        %v1356 = vpop.f32.mrb[0].mxu0
        %1357 = vmatprep.mubr.bf16.mxu0 0
        %1358 = vmatmul.mubr.bf16.gmra.mrb[0].mxu0 %v1222
        %v1359 = vpop.f32.mrb[0].mxu0
        %v1360 = vadd.f32 %v1259, %v1359
        %v1361 = vpop.f32.mrb[0].mxu0
        %v1362 = vpop.f32.mrb[0].mxu0
        %v1363 = vadd.f32 %v1259, %v1362
        %v1364 = vpop.f32.mrb[0].mxu0
        %1365 = vmatprep.mubr.bf16.mxu0 0
        %1366 = vmatmul.mubr.bf16.gmra.mrb[0].mxu0 %v1223
        %v1367 = vpop.f32.mrb[0].mxu0
        %v1368 = vadd.f32 %v1259, %v1367
        %v1369 = vpop.f32.mrb[0].mxu0
        %v1370 = vpop.f32.mrb[0].mxu0
        %v1371 = vadd.f32 %v1259, %v1370
        %v1372 = vpop.f32.mrb[0].mxu0
        %1373 = vmatprep.mubr.bf16.mxu0 0
        %1374 = vmatmul.mubr.bf16.gmra.mrb[0].mxu0 %v1224
        %v1375 = vpop.f32.mrb[0].mxu0
        %v1376 = vadd.f32 %v1259, %v1375
        %v1377 = vpop.f32.mrb[0].mxu0
        %v1378 = vpop.f32.mrb[0].mxu0
        %v1379 = vadd.f32 %v1259, %v1378
        %v1380 = vpop.f32.mrb[0].mxu0
        %1381 = vmatprep.mubr.bf16.mxu0 0
        %1382 = vmatmul.mubr.bf16.gmra.mrb[0].mxu0 %v1225
        %v1383 = vpop.f32.mrb[0].mxu0
        %v1384 = vadd.f32 %v1259, %v1383
        %v1385 = vpop.f32.mrb[0].mxu0
        %v1386 = vpop.f32.mrb[0].mxu0
        %v1387 = vadd.f32 %v1259, %v1386
        %v1388 = vpop.f32.mrb[0].mxu0
        %1389 = vmatprep.mubr.bf16.mxu0 0
        %1390 = vmatmul.mubr.bf16.gmra.mrb[0].mxu0 %v1226
        %v1391 = vpop.f32.mrb[0].mxu0
        %v1392 = vadd.f32 %v1259, %v1391
        %v1393 = vpop.f32.mrb[0].mxu0
        %v1394 = vpop.f32.mrb[0].mxu0
        %v1395 = vadd.f32 %v1259, %v1394
        %v1396 = vpop.f32.mrb[0].mxu0
        %1397 = vmatprep.mubr.bf16.mxu0 0
        %1398 = vmatmul.mubr.bf16.gmra.mrb[0].mxu0 %v1227
        %v1399 = vpop.f32.mrb[0].mxu0
        %v1400 = vadd.f32 %v1259, %v1399
        %v1401 = vpop.f32.mrb[0].mxu0
        %v1402 = vpop.f32.mrb[0].mxu0
        %v1403 = vadd.f32 %v1259, %v1402
        %v1404 = vpop.f32.mrb[0].mxu0
        %1405 = vdwg.mxu0
        %vm1406 = vcmp.ge.f32.partialorder %v1344, 0.0
        %vm1407 = vcmp.ge.f32.partialorder %v1347, 0.0
        %vm1408 = vcmp.ge.f32.partialorder %v1352, 0.0
        %vm1409 = vcmp.ge.f32.partialorder %v1355, 0.0
        %vm1410 = vcmp.ge.f32.partialorder %v1360, 0.0
        %vm1411 = vcmp.ge.f32.partialorder %v1363, 0.0
        %vm1412 = vcmp.ge.f32.partialorder %v1368, 0.0
        %vm1413 = vcmp.ge.f32.partialorder %v1371, 0.0
        %vm1414 = vcmp.ge.f32.partialorder %v1376, 0.0
        %vm1415 = vcmp.ge.f32.partialorder %v1379, 0.0
        %vm1416 = vcmp.ge.f32.partialorder %v1384, 0.0
        %vm1417 = vcmp.ge.f32.partialorder %v1387, 0.0
        %vm1418 = vcmp.ge.f32.partialorder %v1392, 0.0
        %vm1419 = vcmp.ge.f32.partialorder %v1395, 0.0
        %vm1420 = vcmp.ge.f32.partialorder %v1400, 0.0
        %vm1421 = vcmp.ge.f32.partialorder %v1403, 0.0
        %v1422 = vsel %vm1406, 1.4142135, 0.28284273
        %v1423 = vsel %vm1407, 1.4142135, 0.28284273
        %v1424 = vsel %vm1408, 1.4142135, 0.28284273
        %v1425 = vsel %vm1409, 1.4142135, 0.28284273
        %v1426 = vsel %vm1410, 1.4142135, 0.28284273
        %v1427 = vsel %vm1411, 1.4142135, 0.28284273
        %v1428 = vsel %vm1412, 1.4142135, 0.28284273
        %v1429 = vsel %vm1413, 1.4142135, 0.28284273
        %v1430 = vsel %vm1414, 1.4142135, 0.28284273
        %v1431 = vsel %vm1415, 1.4142135, 0.28284273
        %v1432 = vsel %vm1416, 1.4142135, 0.28284273
        %v1433 = vsel %vm1417, 1.4142135, 0.28284273
        %v1434 = vsel %vm1418, 1.4142135, 0.28284273
        %v1435 = vsel %vm1419, 1.4142135, 0.28284273
        %v1436 = vsel %vm1420, 1.4142135, 0.28284273
        %v1437 = vsel %vm1421, 1.4142135, 0.28284273
        %v1438 = vmul.f32 %v1344, %v1422
        %v1439 = vmul.f32 %v1347, %v1423
        %v1440 = vmul.f32 %v1352, %v1424
        %v1441 = vmul.f32 %v1355, %v1425
        %v1442 = vmul.f32 %v1360, %v1426
        %v1443 = vmul.f32 %v1363, %v1427
        %v1444 = vmul.f32 %v1368, %v1428
        %v1445 = vmul.f32 %v1371, %v1429
        %v1446 = vmul.f32 %v1376, %v1430
        %v1447 = vmul.f32 %v1379, %v1431
        %v1448 = vmul.f32 %v1384, %v1432
        %v1449 = vmul.f32 %v1387, %v1433
        %v1450 = vmul.f32 %v1392, %v1434
        %v1451 = vmul.f32 %v1395, %v1435
        %v1452 = vmul.f32 %v1400, %v1436
        %v1453 = vmul.f32 %v1403, %v1437
        %1454 = vmatprep.subr.bf16.mxu0 0
        %1455 = vmatpush1.bf16.msra.mxu0 %v1293
        %1456 = vmatprep.subr.bf16.mxu0 0
        %1457 = vmatpush1.bf16.msra.mxu0 %v1294
        %1458 = vmatprep.subr.bf16.mxu0 0
        %1459 = vmatpush1.bf16.msra.mxu0 %v1295
        %1460 = vmatprep.subr.bf16.mxu0 0
        %1461 = vmatpush1.bf16.msra.mxu0 %v1296
        %1462 = vmatprep.subr.bf16.mxu0 0
        %1463 = vmatpush1.bf16.msra.mxu0 %v1297
        %1464 = vmatprep.subr.bf16.mxu0 0
        %1465 = vmatpush1.bf16.msra.mxu0 %v1298
        %1466 = vmatprep.subr.bf16.mxu0 0
        %1467 = vmatpush1.bf16.msra.mxu0 %v1299
        %1468 = vmatprep.subr.bf16.mxu0 0
        %1469 = vmatpush1.bf16.msra.mxu0 %v1300
        %1470 = vmatprep.subr.bf16.mxu0 0
        %1471 = vmatpush1.bf16.msra.mxu0 0
        %1472 = vmatprep.subr.bf16.mxu0 0
        %1473 = vmatpush1.bf16.msra.mxu0 0
        %1474 = vmatprep.subr.bf16.mxu0 0
        %1475 = vmatpush1.bf16.msra.mxu0 0
        %1476 = vmatprep.subr.bf16.mxu0 0
        %1477 = vmatpush1.bf16.msra.mxu0 0
        %1478 = vmatprep.subr.bf16.mxu0 0
        %1479 = vmatpush1.bf16.msra.mxu0 0
        %1480 = vmatprep.subr.bf16.mxu0 0
        %1481 = vmatpush1.bf16.msra.mxu0 0
        %1482 = vmatprep.subr.bf16.mxu0 0
        %1483 = vmatpush1.bf16.msra.mxu0 0
        %1484 = vmatprep.subr.bf16.mxu0 0
        %1485 = vmatpush1.bf16.msra.mxu0 0
        %1486 = vmatprep.mubr.bf16.mxu0 0
        %1487 = vmatmul.mubr.bf16.gmra.mrb[0].mxu0 %v1228
        %v1488 = vpop.f32.mrb[0].mxu0
        %v1489 = vadd.f32 %v1259, %v1488
        %v1490 = vpop.f32.mrb[0].mxu0
        %v1491 = vpop.f32.mrb[0].mxu0
        %v1492 = vadd.f32 %v1259, %v1491
        %v1493 = vpop.f32.mrb[0].mxu0
        %1494 = vmatprep.mubr.bf16.mxu0 0
        %1495 = vmatmul.mubr.bf16.gmra.mrb[0].mxu0 %v1229
        %v1496 = vpop.f32.mrb[0].mxu0
        %v1497 = vadd.f32 %v1259, %v1496
        %v1498 = vpop.f32.mrb[0].mxu0
        %v1499 = vpop.f32.mrb[0].mxu0
        %v1500 = vadd.f32 %v1259, %v1499
        %v1501 = vpop.f32.mrb[0].mxu0
        %1502 = vmatprep.mubr.bf16.mxu0 0
        %1503 = vmatmul.mubr.bf16.gmra.mrb[0].mxu0 %v1230
        %v1504 = vpop.f32.mrb[0].mxu0
        %v1505 = vadd.f32 %v1259, %v1504
        %v1506 = vpop.f32.mrb[0].mxu0
        %v1507 = vpop.f32.mrb[0].mxu0
        %v1508 = vadd.f32 %v1259, %v1507
        %v1509 = vpop.f32.mrb[0].mxu0
        %1510 = vmatprep.mubr.bf16.mxu0 0
        %1511 = vmatmul.mubr.bf16.gmra.mrb[0].mxu0 %v1231
        %v1512 = vpop.f32.mrb[0].mxu0
        %v1513 = vadd.f32 %v1259, %v1512
        %v1514 = vpop.f32.mrb[0].mxu0
        %v1515 = vpop.f32.mrb[0].mxu0
        %v1516 = vadd.f32 %v1259, %v1515
        %v1517 = vpop.f32.mrb[0].mxu0
        %1518 = vmatprep.mubr.bf16.mxu0 0
        %1519 = vmatmul.mubr.bf16.gmra.mrb[0].mxu0 %v1232
        %v1520 = vpop.f32.mrb[0].mxu0
        %v1521 = vadd.f32 %v1259, %v1520
        %v1522 = vpop.f32.mrb[0].mxu0
        %v1523 = vpop.f32.mrb[0].mxu0
        %v1524 = vadd.f32 %v1259, %v1523
        %v1525 = vpop.f32.mrb[0].mxu0
        %1526 = vmatprep.mubr.bf16.mxu0 0
        %1527 = vmatmul.mubr.bf16.gmra.mrb[0].mxu0 %v1233
        %v1528 = vpop.f32.mrb[0].mxu0
        %v1529 = vadd.f32 %v1259, %v1528
        %v1530 = vpop.f32.mrb[0].mxu0
        %v1531 = vpop.f32.mrb[0].mxu0
        %v1532 = vadd.f32 %v1259, %v1531
        %v1533 = vpop.f32.mrb[0].mxu0
        %1534 = vmatprep.mubr.bf16.mxu0 0
        %1535 = vmatmul.mubr.bf16.gmra.mrb[0].mxu0 %v1234
        %v1536 = vpop.f32.mrb[0].mxu0
        %v1537 = vadd.f32 %v1259, %v1536
        %v1538 = vpop.f32.mrb[0].mxu0
        %v1539 = vpop.f32.mrb[0].mxu0
        %v1540 = vadd.f32 %v1259, %v1539
        %v1541 = vpop.f32.mrb[0].mxu0
        %1542 = vmatprep.mubr.bf16.mxu0 0
        %1543 = vmatmul.mubr.bf16.gmra.mrb[0].mxu0 %v1235
        %v1544 = vpop.f32.mrb[0].mxu0
        %v1545 = vadd.f32 %v1259, %v1544
        %v1546 = vpop.f32.mrb[0].mxu0
        %v1547 = vpop.f32.mrb[0].mxu0
        %v1548 = vadd.f32 %v1259, %v1547
        %v1549 = vpop.f32.mrb[0].mxu0
        %1550 = vdwg.mxu0
        %vm1551 = vcmp.ge.f32.partialorder %v1489, 0.0
        %vm1552 = vcmp.ge.f32.partialorder %v1492, 0.0
        %vm1553 = vcmp.ge.f32.partialorder %v1497, 0.0
        %vm1554 = vcmp.ge.f32.partialorder %v1500, 0.0
        %vm1555 = vcmp.ge.f32.partialorder %v1505, 0.0
        %vm1556 = vcmp.ge.f32.partialorder %v1508, 0.0
        %vm1557 = vcmp.ge.f32.partialorder %v1513, 0.0
        %vm1558 = vcmp.ge.f32.partialorder %v1516, 0.0
        %vm1559 = vcmp.ge.f32.partialorder %v1521, 0.0
        %vm1560 = vcmp.ge.f32.partialorder %v1524, 0.0
        %vm1561 = vcmp.ge.f32.partialorder %v1529, 0.0
        %vm1562 = vcmp.ge.f32.partialorder %v1532, 0.0
        %vm1563 = vcmp.ge.f32.partialorder %v1537, 0.0
        %vm1564 = vcmp.ge.f32.partialorder %v1540, 0.0
        %vm1565 = vcmp.ge.f32.partialorder %v1545, 0.0
        %vm1566 = vcmp.ge.f32.partialorder %v1548, 0.0
        %v1567 = vsel %vm1551, 1.4142135, 0.28284273
        %v1568 = vsel %vm1552, 1.4142135, 0.28284273
        %v1569 = vsel %vm1553, 1.4142135, 0.28284273
        %v1570 = vsel %vm1554, 1.4142135, 0.28284273
        %v1571 = vsel %vm1555, 1.4142135, 0.28284273
        %v1572 = vsel %vm1556, 1.4142135, 0.28284273
        %v1573 = vsel %vm1557, 1.4142135, 0.28284273
        %v1574 = vsel %vm1558, 1.4142135, 0.28284273
        %v1575 = vsel %vm1559, 1.4142135, 0.28284273
        %v1576 = vsel %vm1560, 1.4142135, 0.28284273
        %v1577 = vsel %vm1561, 1.4142135, 0.28284273
        %v1578 = vsel %vm1562, 1.4142135, 0.28284273
        %v1579 = vsel %vm1563, 1.4142135, 0.28284273
        %v1580 = vsel %vm1564, 1.4142135, 0.28284273
        %v1581 = vsel %vm1565, 1.4142135, 0.28284273
        %v1582 = vsel %vm1566, 1.4142135, 0.28284273
        %v1583 = vmul.f32 %v1489, %v1567
        %v1584 = vmul.f32 %v1492, %v1568
        %v1585 = vmul.f32 %v1497, %v1569
        %v1586 = vmul.f32 %v1500, %v1570
        %v1587 = vmul.f32 %v1505, %v1571
        %v1588 = vmul.f32 %v1508, %v1572
        %v1589 = vmul.f32 %v1513, %v1573
        %v1590 = vmul.f32 %v1516, %v1574
        %v1591 = vmul.f32 %v1521, %v1575
        %v1592 = vmul.f32 %v1524, %v1576
        %v1593 = vmul.f32 %v1529, %v1577
        %v1594 = vmul.f32 %v1532, %v1578
        %v1595 = vmul.f32 %v1537, %v1579
        %v1596 = vmul.f32 %v1540, %v1580
        %v1597 = vmul.f32 %v1545, %v1581
        %v1598 = vmul.f32 %v1548, %v1582
        %v1599 = vpack.c.bf16 %v1439, %v1438
        %v1600 = vpack.c.bf16 %v1441, %v1440
        %v1601 = vpack.c.bf16 %v1443, %v1442
        %v1602 = vpack.c.bf16 %v1445, %v1444
        %v1603 = vpack.c.bf16 %v1447, %v1446
        %v1604 = vpack.c.bf16 %v1449, %v1448
        %v1605 = vpack.c.bf16 %v1451, %v1450
        %v1606 = vpack.c.bf16 %v1453, %v1452
        %v1607 = vpack.c.bf16 %v1584, %v1583
        %v1608 = vpack.c.bf16 %v1586, %v1585
        %v1609 = vpack.c.bf16 %v1588, %v1587
        %v1610 = vpack.c.bf16 %v1590, %v1589
        %v1611 = vpack.c.bf16 %v1592, %v1591
        %v1612 = vpack.c.bf16 %v1594, %v1593
        %v1613 = vpack.c.bf16 %v1596, %v1595
        %v1614 = vpack.c.bf16 %v1598, %v1597
        %s1615 = scalar_lea.vmem [#allocation5], 192
        %v1616 = vld [vmem:[%s1615] sm:$0xf]
        %v1617 = vld [vmem:[%s1615 + $0x4] sm:$0xf]
        %v1618 = vld [vmem:[%s1615 + $0x8] sm:$0xf]
        %v1619 = vld [vmem:[%s1615 + $0xc] sm:$0xf]
        %v1620 = vld [vmem:[%s1615 + $0x10] sm:$0xf]
        %v1621 = vld [vmem:[%s1615 + $0x14] sm:$0xf]
        %v1622 = vld [vmem:[%s1615 + $0x18] sm:$0xf]
        %v1623 = vld [vmem:[%s1615 + $0x1c] sm:$0xf]
        %v1624 = vld [vmem:[%s1615 + $0x20] sm:$0xf]
        %v1625 = vld [vmem:[%s1615 + $0x24] sm:$0xf]
        %v1626 = vld [vmem:[%s1615 + $0x28] sm:$0xf]
        %v1627 = vld [vmem:[%s1615 + $0x2c] sm:$0xf]
        %v1628 = vld [vmem:[%s1615 + $0x30] sm:$0xf]
        %v1629 = vld [vmem:[%s1615 + $0x34] sm:$0xf]
        %v1630 = vld [vmem:[%s1615 + $0x38] sm:$0xf]
        %v1631 = vld [vmem:[%s1615 + $0x3c] sm:$0xf]
        %s1632 = scalar_lea.vmem %s2, 3
        %v1633 = vld [vmem:[%s1632] sm:$0x1]
        %v1635 = vlaneseq
        %v1636 = vshrl.u32 %v1635, 7
        %v1637 = vsub.s32 0, %v1636
        %v1638 = vrot.slane %v1633, %v1637
        %v1656 = vunpack.c.l.b16 %v1616
        %v1657 = vunpack.c.l.b16 %v1617
        %v1658 = vunpack.c.l.b16 %v1618
        %v1659 = vunpack.c.l.b16 %v1619
        %v1660 = vunpack.c.l.b16 %v1620
        %v1661 = vunpack.c.l.b16 %v1621
        %v1662 = vunpack.c.l.b16 %v1622
        %v1663 = vunpack.c.l.b16 %v1623
        %v1664 = vunpack.c.l.b16 %v1624
        %v1665 = vunpack.c.l.b16 %v1625
        %v1666 = vunpack.c.l.b16 %v1626
        %v1667 = vunpack.c.l.b16 %v1627
        %v1668 = vunpack.c.l.b16 %v1628
        %v1669 = vunpack.c.l.b16 %v1629
        %v1670 = vunpack.c.l.b16 %v1630
        %v1671 = vunpack.c.l.b16 %v1631
        %v1672 = vpack.c.b16 %v1657, %v1656
        %v1673 = vpack.c.b16 %v1659, %v1658
        %v1674 = vpack.c.b16 %v1661, %v1660
        %v1675 = vpack.c.b16 %v1663, %v1662
        %v1676 = vpack.c.b16 %v1665, %v1664
        %v1677 = vpack.c.b16 %v1667, %v1666
        %v1678 = vpack.c.b16 %v1669, %v1668
        %v1679 = vpack.c.b16 %v1671, %v1670
        %1688 = vmatprep.subr.bf16.mxu0 0
        %1689 = vmatpush1.bf16.msra.mxu0 %v1672
        %1690 = vmatprep.subr.bf16.mxu0 0
        %1691 = vmatpush1.bf16.msra.mxu0 %v1673
        %1692 = vmatprep.subr.bf16.mxu0 0
        %1693 = vmatpush1.bf16.msra.mxu0 %v1674
        %1694 = vmatprep.subr.bf16.mxu0 0
        %1695 = vmatpush1.bf16.msra.mxu0 %v1675
        %1696 = vmatprep.subr.bf16.mxu0 0
        %1697 = vmatpush1.bf16.msra.mxu0 %v1676
        %1698 = vmatprep.subr.bf16.mxu0 0
        %1699 = vmatpush1.bf16.msra.mxu0 %v1677
        %1700 = vmatprep.subr.bf16.mxu0 0
        %1701 = vmatpush1.bf16.msra.mxu0 %v1678
        %1702 = vmatprep.subr.bf16.mxu0 0
        %1703 = vmatpush1.bf16.msra.mxu0 %v1679
        %1704 = vmatprep.subr.bf16.mxu0 0
        %1705 = vmatpush1.bf16.msra.mxu0 0
        %1706 = vmatprep.subr.bf16.mxu0 0
        %1707 = vmatpush1.bf16.msra.mxu0 0
        %1708 = vmatprep.subr.bf16.mxu0 0
        %1709 = vmatpush1.bf16.msra.mxu0 0
        %1710 = vmatprep.subr.bf16.mxu0 0
        %1711 = vmatpush1.bf16.msra.mxu0 0
        %1712 = vmatprep.subr.bf16.mxu0 0
        %1713 = vmatpush1.bf16.msra.mxu0 0
        %1714 = vmatprep.subr.bf16.mxu0 0
        %1715 = vmatpush1.bf16.msra.mxu0 0
        %1716 = vmatprep.subr.bf16.mxu0 0
        %1717 = vmatpush1.bf16.msra.mxu0 0
        %1718 = vmatprep.subr.bf16.mxu0 0
        %1719 = vmatpush1.bf16.msra.mxu0 0
        %1720 = vmatprep.mubr.bf16.mxu0 0
        %1721 = vmatmul.mubr.bf16.gmra.mrb[0].mxu0 %v1599
        %v1722 = vpop.f32.mrb[0].mxu0
        %v1723 = vadd.f32 %v1638, %v1722
        %v1724 = vpop.f32.mrb[0].mxu0
        %v1725 = vpop.f32.mrb[0].mxu0
        %v1726 = vadd.f32 %v1638, %v1725
        %v1727 = vpop.f32.mrb[0].mxu0
        %1728 = vmatprep.mubr.bf16.mxu0 0
        %1729 = vmatmul.mubr.bf16.gmra.mrb[0].mxu0 %v1600
        %v1730 = vpop.f32.mrb[0].mxu0
        %v1731 = vadd.f32 %v1638, %v1730
        %v1732 = vpop.f32.mrb[0].mxu0
        %v1733 = vpop.f32.mrb[0].mxu0
        %v1734 = vadd.f32 %v1638, %v1733
        %v1735 = vpop.f32.mrb[0].mxu0
        %1736 = vmatprep.mubr.bf16.mxu0 0
        %1737 = vmatmul.mubr.bf16.gmra.mrb[0].mxu0 %v1601
        %v1738 = vpop.f32.mrb[0].mxu0
        %v1739 = vadd.f32 %v1638, %v1738
        %v1740 = vpop.f32.mrb[0].mxu0
        %v1741 = vpop.f32.mrb[0].mxu0
        %v1742 = vadd.f32 %v1638, %v1741
        %v1743 = vpop.f32.mrb[0].mxu0
        %1744 = vmatprep.mubr.bf16.mxu0 0
        %1745 = vmatmul.mubr.bf16.gmra.mrb[0].mxu0 %v1602
        %v1746 = vpop.f32.mrb[0].mxu0
        %v1747 = vadd.f32 %v1638, %v1746
        %v1748 = vpop.f32.mrb[0].mxu0
        %v1749 = vpop.f32.mrb[0].mxu0
        %v1750 = vadd.f32 %v1638, %v1749
        %v1751 = vpop.f32.mrb[0].mxu0
        %1752 = vmatprep.mubr.bf16.mxu0 0
        %1753 = vmatmul.mubr.bf16.gmra.mrb[0].mxu0 %v1603
        %v1754 = vpop.f32.mrb[0].mxu0
        %v1755 = vadd.f32 %v1638, %v1754
        %v1756 = vpop.f32.mrb[0].mxu0
        %v1757 = vpop.f32.mrb[0].mxu0
        %v1758 = vadd.f32 %v1638, %v1757
        %v1759 = vpop.f32.mrb[0].mxu0
        %1760 = vmatprep.mubr.bf16.mxu0 0
        %1761 = vmatmul.mubr.bf16.gmra.mrb[0].mxu0 %v1604
        %v1762 = vpop.f32.mrb[0].mxu0
        %v1763 = vadd.f32 %v1638, %v1762
        %v1764 = vpop.f32.mrb[0].mxu0
        %v1765 = vpop.f32.mrb[0].mxu0
        %v1766 = vadd.f32 %v1638, %v1765
        %v1767 = vpop.f32.mrb[0].mxu0
        %1768 = vmatprep.mubr.bf16.mxu0 0
        %1769 = vmatmul.mubr.bf16.gmra.mrb[0].mxu0 %v1605
        %v1770 = vpop.f32.mrb[0].mxu0
        %v1771 = vadd.f32 %v1638, %v1770
        %v1772 = vpop.f32.mrb[0].mxu0
        %v1773 = vpop.f32.mrb[0].mxu0
        %v1774 = vadd.f32 %v1638, %v1773
        %v1775 = vpop.f32.mrb[0].mxu0
        %1776 = vmatprep.mubr.bf16.mxu0 0
        %1777 = vmatmul.mubr.bf16.gmra.mrb[0].mxu0 %v1606
        %v1778 = vpop.f32.mrb[0].mxu0
        %v1779 = vadd.f32 %v1638, %v1778
        %v1780 = vpop.f32.mrb[0].mxu0
        %v1781 = vpop.f32.mrb[0].mxu0
        %v1782 = vadd.f32 %v1638, %v1781
        %v1783 = vpop.f32.mrb[0].mxu0
        %1784 = vdwg.mxu0
        %vm1785 = vcmp.ge.f32.partialorder %v1723, 0.0
        %vm1786 = vcmp.ge.f32.partialorder %v1726, 0.0
        %vm1787 = vcmp.ge.f32.partialorder %v1731, 0.0
        %vm1788 = vcmp.ge.f32.partialorder %v1734, 0.0
        %vm1789 = vcmp.ge.f32.partialorder %v1739, 0.0
        %vm1790 = vcmp.ge.f32.partialorder %v1742, 0.0
        %vm1791 = vcmp.ge.f32.partialorder %v1747, 0.0
        %vm1792 = vcmp.ge.f32.partialorder %v1750, 0.0
        %vm1793 = vcmp.ge.f32.partialorder %v1755, 0.0
        %vm1794 = vcmp.ge.f32.partialorder %v1758, 0.0
        %vm1795 = vcmp.ge.f32.partialorder %v1763, 0.0
        %vm1796 = vcmp.ge.f32.partialorder %v1766, 0.0
        %vm1797 = vcmp.ge.f32.partialorder %v1771, 0.0
        %vm1798 = vcmp.ge.f32.partialorder %v1774, 0.0
        %vm1799 = vcmp.ge.f32.partialorder %v1779, 0.0
        %vm1800 = vcmp.ge.f32.partialorder %v1782, 0.0
        %v1801 = vsel %vm1785, 1.4142135, 0.28284273
        %v1802 = vsel %vm1786, 1.4142135, 0.28284273
        %v1803 = vsel %vm1787, 1.4142135, 0.28284273
        %v1804 = vsel %vm1788, 1.4142135, 0.28284273
        %v1805 = vsel %vm1789, 1.4142135, 0.28284273
        %v1806 = vsel %vm1790, 1.4142135, 0.28284273
        %v1807 = vsel %vm1791, 1.4142135, 0.28284273
        %v1808 = vsel %vm1792, 1.4142135, 0.28284273
        %v1809 = vsel %vm1793, 1.4142135, 0.28284273
        %v1810 = vsel %vm1794, 1.4142135, 0.28284273
        %v1811 = vsel %vm1795, 1.4142135, 0.28284273
        %v1812 = vsel %vm1796, 1.4142135, 0.28284273
        %v1813 = vsel %vm1797, 1.4142135, 0.28284273
        %v1814 = vsel %vm1798, 1.4142135, 0.28284273
        %v1815 = vsel %vm1799, 1.4142135, 0.28284273
        %v1816 = vsel %vm1800, 1.4142135, 0.28284273
        %v1817 = vmul.f32 %v1723, %v1801
        %v1818 = vmul.f32 %v1726, %v1802
        %v1819 = vmul.f32 %v1731, %v1803
        %v1820 = vmul.f32 %v1734, %v1804
        %v1821 = vmul.f32 %v1739, %v1805
        %v1822 = vmul.f32 %v1742, %v1806
        %v1823 = vmul.f32 %v1747, %v1807
        %v1824 = vmul.f32 %v1750, %v1808
        %v1825 = vmul.f32 %v1755, %v1809
        %v1826 = vmul.f32 %v1758, %v1810
        %v1827 = vmul.f32 %v1763, %v1811
        %v1828 = vmul.f32 %v1766, %v1812
        %v1829 = vmul.f32 %v1771, %v1813
        %v1830 = vmul.f32 %v1774, %v1814
        %v1831 = vmul.f32 %v1779, %v1815
        %v1832 = vmul.f32 %v1782, %v1816
        %1833 = vmatprep.subr.bf16.mxu0 0
        %1834 = vmatpush1.bf16.msra.mxu0 %v1672
        %1835 = vmatprep.subr.bf16.mxu0 0
        %1836 = vmatpush1.bf16.msra.mxu0 %v1673
        %1837 = vmatprep.subr.bf16.mxu0 0
        %1838 = vmatpush1.bf16.msra.mxu0 %v1674
        %1839 = vmatprep.subr.bf16.mxu0 0
        %1840 = vmatpush1.bf16.msra.mxu0 %v1675
        %1841 = vmatprep.subr.bf16.mxu0 0
        %1842 = vmatpush1.bf16.msra.mxu0 %v1676
        %1843 = vmatprep.subr.bf16.mxu0 0
        %1844 = vmatpush1.bf16.msra.mxu0 %v1677
        %1845 = vmatprep.subr.bf16.mxu0 0
        %1846 = vmatpush1.bf16.msra.mxu0 %v1678
        %1847 = vmatprep.subr.bf16.mxu0 0
        %1848 = vmatpush1.bf16.msra.mxu0 %v1679
        %1849 = vmatprep.subr.bf16.mxu0 0
        %1850 = vmatpush1.bf16.msra.mxu0 0
        %1851 = vmatprep.subr.bf16.mxu0 0
        %1852 = vmatpush1.bf16.msra.mxu0 0
        %1853 = vmatprep.subr.bf16.mxu0 0
        %1854 = vmatpush1.bf16.msra.mxu0 0
        %1855 = vmatprep.subr.bf16.mxu0 0
        %1856 = vmatpush1.bf16.msra.mxu0 0
        %1857 = vmatprep.subr.bf16.mxu0 0
        %1858 = vmatpush1.bf16.msra.mxu0 0
        %1859 = vmatprep.subr.bf16.mxu0 0
        %1860 = vmatpush1.bf16.msra.mxu0 0
        %1861 = vmatprep.subr.bf16.mxu0 0
        %1862 = vmatpush1.bf16.msra.mxu0 0
        %1863 = vmatprep.subr.bf16.mxu0 0
        %1864 = vmatpush1.bf16.msra.mxu0 0
        %1865 = vmatprep.mubr.bf16.mxu0 0
        %1866 = vmatmul.mubr.bf16.gmra.mrb[0].mxu0 %v1607
        %v1867 = vpop.f32.mrb[0].mxu0
        %v1868 = vadd.f32 %v1638, %v1867
        %v1869 = vpop.f32.mrb[0].mxu0
        %v1870 = vpop.f32.mrb[0].mxu0
        %v1871 = vadd.f32 %v1638, %v1870
        %v1872 = vpop.f32.mrb[0].mxu0
        %1873 = vmatprep.mubr.bf16.mxu0 0
        %1874 = vmatmul.mubr.bf16.gmra.mrb[0].mxu0 %v1608
        %v1875 = vpop.f32.mrb[0].mxu0
        %v1876 = vadd.f32 %v1638, %v1875
        %v1877 = vpop.f32.mrb[0].mxu0
        %v1878 = vpop.f32.mrb[0].mxu0
        %v1879 = vadd.f32 %v1638, %v1878
        %v1880 = vpop.f32.mrb[0].mxu0
        %1881 = vmatprep.mubr.bf16.mxu0 0
        %1882 = vmatmul.mubr.bf16.gmra.mrb[0].mxu0 %v1609
        %v1883 = vpop.f32.mrb[0].mxu0
        %v1884 = vadd.f32 %v1638, %v1883
        %v1885 = vpop.f32.mrb[0].mxu0
        %v1886 = vpop.f32.mrb[0].mxu0
        %v1887 = vadd.f32 %v1638, %v1886
        %v1888 = vpop.f32.mrb[0].mxu0
        %1889 = vmatprep.mubr.bf16.mxu0 0
        %1890 = vmatmul.mubr.bf16.gmra.mrb[0].mxu0 %v1610
        %v1891 = vpop.f32.mrb[0].mxu0
        %v1892 = vadd.f32 %v1638, %v1891
        %v1893 = vpop.f32.mrb[0].mxu0
        %v1894 = vpop.f32.mrb[0].mxu0
        %v1895 = vadd.f32 %v1638, %v1894
        %v1896 = vpop.f32.mrb[0].mxu0
        %1897 = vmatprep.mubr.bf16.mxu0 0
        %1898 = vmatmul.mubr.bf16.gmra.mrb[0].mxu0 %v1611
        %v1899 = vpop.f32.mrb[0].mxu0
        %v1900 = vadd.f32 %v1638, %v1899
        %v1901 = vpop.f32.mrb[0].mxu0
        %v1902 = vpop.f32.mrb[0].mxu0
        %v1903 = vadd.f32 %v1638, %v1902
        %v1904 = vpop.f32.mrb[0].mxu0
        %1905 = vmatprep.mubr.bf16.mxu0 0
        %1906 = vmatmul.mubr.bf16.gmra.mrb[0].mxu0 %v1612
        %v1907 = vpop.f32.mrb[0].mxu0
        %v1908 = vadd.f32 %v1638, %v1907
        %v1909 = vpop.f32.mrb[0].mxu0
        %v1910 = vpop.f32.mrb[0].mxu0
        %v1911 = vadd.f32 %v1638, %v1910
        %v1912 = vpop.f32.mrb[0].mxu0
        %1913 = vmatprep.mubr.bf16.mxu0 0
        %1914 = vmatmul.mubr.bf16.gmra.mrb[0].mxu0 %v1613
        %v1915 = vpop.f32.mrb[0].mxu0
        %v1916 = vadd.f32 %v1638, %v1915
        %v1917 = vpop.f32.mrb[0].mxu0
        %v1918 = vpop.f32.mrb[0].mxu0
        %v1919 = vadd.f32 %v1638, %v1918
        %v1920 = vpop.f32.mrb[0].mxu0
        %1921 = vmatprep.mubr.bf16.mxu0 0
        %1922 = vmatmul.mubr.bf16.gmra.mrb[0].mxu0 %v1614
        %v1923 = vpop.f32.mrb[0].mxu0
        %v1924 = vadd.f32 %v1638, %v1923
        %v1925 = vpop.f32.mrb[0].mxu0
        %v1926 = vpop.f32.mrb[0].mxu0
        %v1927 = vadd.f32 %v1638, %v1926
        %v1928 = vpop.f32.mrb[0].mxu0
        %1929 = vdwg.mxu0
        %vm1930 = vcmp.ge.f32.partialorder %v1868, 0.0
        %vm1931 = vcmp.ge.f32.partialorder %v1871, 0.0
        %vm1932 = vcmp.ge.f32.partialorder %v1876, 0.0
        %vm1933 = vcmp.ge.f32.partialorder %v1879, 0.0
        %vm1934 = vcmp.ge.f32.partialorder %v1884, 0.0
        %vm1935 = vcmp.ge.f32.partialorder %v1887, 0.0
        %vm1936 = vcmp.ge.f32.partialorder %v1892, 0.0
        %vm1937 = vcmp.ge.f32.partialorder %v1895, 0.0
        %vm1938 = vcmp.ge.f32.partialorder %v1900, 0.0
        %vm1939 = vcmp.ge.f32.partialorder %v1903, 0.0
        %vm1940 = vcmp.ge.f32.partialorder %v1908, 0.0
        %vm1941 = vcmp.ge.f32.partialorder %v1911, 0.0
        %vm1942 = vcmp.ge.f32.partialorder %v1916, 0.0
        %vm1943 = vcmp.ge.f32.partialorder %v1919, 0.0
        %vm1944 = vcmp.ge.f32.partialorder %v1924, 0.0
        %vm1945 = vcmp.ge.f32.partialorder %v1927, 0.0
        %v1946 = vsel %vm1930, 1.4142135, 0.28284273
        %v1947 = vsel %vm1931, 1.4142135, 0.28284273
        %v1948 = vsel %vm1932, 1.4142135, 0.28284273
        %v1949 = vsel %vm1933, 1.4142135, 0.28284273
        %v1950 = vsel %vm1934, 1.4142135, 0.28284273
        %v1951 = vsel %vm1935, 1.4142135, 0.28284273
        %v1952 = vsel %vm1936, 1.4142135, 0.28284273
        %v1953 = vsel %vm1937, 1.4142135, 0.28284273
        %v1954 = vsel %vm1938, 1.4142135, 0.28284273
        %v1955 = vsel %vm1939, 1.4142135, 0.28284273
        %v1956 = vsel %vm1940, 1.4142135, 0.28284273
        %v1957 = vsel %vm1941, 1.4142135, 0.28284273
        %v1958 = vsel %vm1942, 1.4142135, 0.28284273
        %v1959 = vsel %vm1943, 1.4142135, 0.28284273
        %v1960 = vsel %vm1944, 1.4142135, 0.28284273
        %v1961 = vsel %vm1945, 1.4142135, 0.28284273
        %v1962 = vmul.f32 %v1868, %v1946
        %v1963 = vmul.f32 %v1871, %v1947
        %v1964 = vmul.f32 %v1876, %v1948
        %v1965 = vmul.f32 %v1879, %v1949
        %v1966 = vmul.f32 %v1884, %v1950
        %v1967 = vmul.f32 %v1887, %v1951
        %v1968 = vmul.f32 %v1892, %v1952
        %v1969 = vmul.f32 %v1895, %v1953
        %v1970 = vmul.f32 %v1900, %v1954
        %v1971 = vmul.f32 %v1903, %v1955
        %v1972 = vmul.f32 %v1908, %v1956
        %v1973 = vmul.f32 %v1911, %v1957
        %v1974 = vmul.f32 %v1916, %v1958
        %v1975 = vmul.f32 %v1919, %v1959
        %v1976 = vmul.f32 %v1924, %v1960
        %v1977 = vmul.f32 %v1927, %v1961
        %1978 = vst [vmem:[%s203] sm:$0xff] %v1817
        %1979 = vst [vmem:[%s203 + $0x8] sm:$0xff] %v1818
        %1980 = vst [vmem:[%s203 + $0x10] sm:$0xff] %v1819
        %1981 = vst [vmem:[%s203 + $0x18] sm:$0xff] %v1820
        %1982 = vst [vmem:[%s203 + $0x20] sm:$0xff] %v1821
        %1983 = vst [vmem:[%s203 + $0x28] sm:$0xff] %v1822
        %1984 = vst [vmem:[%s203 + $0x30] sm:$0xff] %v1823
        %1985 = vst [vmem:[%s203 + $0x38] sm:$0xff] %v1824
        %1986 = vst [vmem:[%s203 + $0x40] sm:$0xff] %v1825
        %1987 = vst [vmem:[%s203 + $0x48] sm:$0xff] %v1826
        %1988 = vst [vmem:[%s203 + $0x50] sm:$0xff] %v1827
        %1989 = vst [vmem:[%s203 + $0x58] sm:$0xff] %v1828
        %1990 = vst [vmem:[%s203 + $0x60] sm:$0xff] %v1829
        %1991 = vst [vmem:[%s203 + $0x68] sm:$0xff] %v1830
        %1992 = vst [vmem:[%s203 + $0x70] sm:$0xff] %v1831
        %1993 = vst [vmem:[%s203 + $0x78] sm:$0xff] %v1832
        %1994 = vst [vmem:[%s203 + $0x80] sm:$0xff] %v1962
        %1995 = vst [vmem:[%s203 + $0x88] sm:$0xff] %v1963
        %1996 = vst [vmem:[%s203 + $0x90] sm:$0xff] %v1964
        %1997 = vst [vmem:[%s203 + $0x98] sm:$0xff] %v1965
        %1998 = vst [vmem:[%s203 + $0xa0] sm:$0xff] %v1966
        %1999 = vst [vmem:[%s203 + $0xa8] sm:$0xff] %v1967
        %2000 = vst [vmem:[%s203 + $0xb0] sm:$0xff] %v1968
        %2001 = vst [vmem:[%s203 + $0xb8] sm:$0xff] %v1969
        %2002 = vst [vmem:[%s203 + $0xc0] sm:$0xff] %v1970
        %2003 = vst [vmem:[%s203 + $0xc8] sm:$0xff] %v1971
        %2004 = vst [vmem:[%s203 + $0xd0] sm:$0xff] %v1972
        %2005 = vst [vmem:[%s203 + $0xd8] sm:$0xff] %v1973
        %2006 = vst [vmem:[%s203 + $0xe0] sm:$0xff] %v1974
        %2007 = vst [vmem:[%s203 + $0xe8] sm:$0xff] %v1975
        %2008 = vst [vmem:[%s203 + $0xf0] sm:$0xff] %v1976
        %2009 = vst [vmem:[%s203 + $0xf8] sm:$0xff] %v1977
        %s2010 = sand.u32 %s97, 1
        %s2011 = scalar_lea.sflag [#allocation4], %s2010
        %s2012 = sand.u32 %s97, 1
        %s2013 = smul.addr %s2012, 256
        %s2014 = scalar_lea.vmem [#allocation7], %s2013
        // Predicated region
        $region41: #{tpu_custom_call.1} parent=31 // pred_check
          %p2015 = pneg %p107
        $region42: #{tpu_custom_call.1} parent=31 // pred_check_branch
          %2017 = sbr.rel (%p2015) target = $region44
        $region43: #{tpu_custom_call.1} parent=31 // pred_region
          %s2018 = smul.u32 32, %s21
          %s2020 = ssub.s32 4096, 4096
          %2021 = vsyncadd %s2011, %s2020
          %s2022 = smul.addr %s2018, 128
          %s2023 = scalar_lea.hbm %s3, %s2022
          %s2024 = sshll.u32 %s2014, 4
          %s2025 = int_to_ptr.vmem [resolvable:$true] %s2024
          %2030 = dma.vmem_to_hbm [thread:$0]  %s2025, 4096, %s2023, %s2011, 128, 128, 8
        $region44: #{tpu_custom_call.1} parent=31 // pred_fallthru
          _
      $region32: #{tpu_custom_call.1} parent=5 // pred_fallthru
        _
      %p2031 = scmp.le.s32.totalorder 2, %s16
      // Predicated region
      $region45: #{tpu_custom_call.1} parent=5 // pred_check
        %p2032 = pneg %p2031
      $region46: #{tpu_custom_call.1} parent=5 // pred_check_branch
        %2034 = sbr.rel (%p2032) target = $region48
      $region47: #{tpu_custom_call.1} parent=5 // pred_region
        %s2035 = ssub.s32 %s16, 2
        // Predicated region
        $region49: #{tpu_custom_call.1} parent=47 // pred_check
          %p2036 = pneg %p113
        $region50: #{tpu_custom_call.1} parent=47 // pred_check_branch
          %2038 = sbr.rel (%p2036) target = $region52
        $region51: #{tpu_custom_call.1} parent=47 // pred_region
          %s2039 = sand.u32 %s98, 1
          %s2040 = scalar_lea.sflag [#allocation4], %s2039
          %s2041 = sand.u32 %s98, 1
          %s2042 = smul.addr %s2041, 256
          %s2043 = scalar_lea.vmem [#allocation7], %s2042
          %2044 = dma.done %s2040, 4096
        $region52: #{tpu_custom_call.1} parent=47 // pred_fallthru
          _
      $region48: #{tpu_custom_call.1} parent=5 // pred_fallthru
        _
    $region6: #{tpu_custom_call.1} parent=1 // loop_footer
      %s20 = sadd.s32 1, %s16
    $region7: #{tpu_custom_call.1} parent=1 // loop_footer_branch
      %15 = sbr.rel target = $region3
    $region8: #{tpu_custom_call.1} parent=1 // loop_exit
      _
    %2045 = vsyncpa [#allocation3], 1
    %s2046 = scalar_lea.sflag [#allocation3], 1
    %2047 = vsyncpa %s2046, 1
    %2048 = vsyncpa [#allocation6], 1
    %2049 = vsyncpa [#allocation4], 1
    %s2050 = scalar_lea.sflag [#allocation4], 1
    %2051 = vsyncpa %s2050, 1

</llo_original>
